<compile_context>
chip_gen: v7x
topology: tpu7x:2x2x1
jax: 0.10.0
libtpu: 0.0.40
codegen_flags: <defaults>
</compile_context>

<pallas_src>
import jax
import jax.numpy as jnp
from jax.experimental import pallas as pl
from jax.experimental.pallas import tpu as pltpu

DEPTH = 3  # ChempropBlock(depth=3, residual=True, reduce='sum', act=ReLU, dropout=0.0)


def chemprop_kernel(v_ref, e_ref, src_ref, dest_ref, rev_ref,
                    wn_ref, bn_ref, we_ref, be_ref, wl_ref, bl_ref,
                    e_out_ref, v_out_ref,
                    h_uv_s, h_rev_s):
    N = v_ref.shape[0]        # padded node count
    M = e_ref.shape[0]        # padded edge count
    depth = wl_ref.shape[0]

    # ---- one-hot scatter/gather operators, built once in VMEM (never DMA'd) ----
    # Padded edges carry src/dest = -1 -> all-zero rows -> contribute nothing.
    col = jax.lax.broadcasted_iota(jnp.int32, (M, N), 1)
    S_src = (col == src_ref[...]).astype(jnp.float32)         # [M, N] f32 (init/final)
    S_src_bf = S_src.astype(jnp.bfloat16)                     # exact 0/1
    S_dest_bf = (col == dest_ref[...]).astype(jnp.bfloat16)   # [M, N]

    # contract over the edge (M) axis directly: no .T, operands consumed as-is
    contract_m = (((0,), (0,)), ((), ()))

    # ---- edge-state init: embed node (gathered at src) + embed edge ----
    node_emb = (jnp.dot(v_ref[...], wn_ref[...], preferred_element_type=jnp.float32)
                + bn_ref[...])                                               # [N, H]
    edge_emb = (jnp.dot(e_ref[...], we_ref[...], preferred_element_type=jnp.float32)
                + be_ref[...])                                               # [M, H]
    E_cur = jnp.dot(S_src, node_emb, preferred_element_type=jnp.float32) + edge_emb

    # ---- depth x Residual(ChempropLayer) ----
    for l in range(depth):
        H_uv = jnp.maximum(E_cur, 0.0)                        # act = ReLU (f32, VPU)
        H_bf = H_uv.astype(jnp.bfloat16)

        # M_v = scatter_sum(H_uv, dest): bf16 MXU dot contracting the edge axis.
        M_v = jax.lax.dot_general(S_dest_bf, H_bf, contract_m,
                                  preferred_element_type=jnp.float32)        # [N, H]
        # gather at src: M_v[src]
        M_src = jnp.dot(S_src_bf, M_v.astype(jnp.bfloat16),
                        preferred_element_type=jnp.float32)                  # [M, H]

        # H_uv[rev_index]: per-row dynamic-slice gather driven by SMEM indices
        # (f32-exact; replaces a dense [M,M] permutation matmul).
        h_uv_s[...] = H_uv

        def gather_body(i, carry):
            r = rev_ref[i]
            h_rev_s[pl.ds(i, 1), :] = h_uv_s[pl.ds(r, 1), :]
            return carry

        jax.lax.fori_loop(0, M, gather_body, 0, unroll=True)

        M_uv = M_src - h_rev_s[...]                                          # [M, H]

        # update = Linear(H, H, bias); Dropout(0.0) is identity in forward/eval.
        E_new = (jnp.dot(M_uv.astype(jnp.bfloat16), wl_ref[l].astype(jnp.bfloat16),
                         preferred_element_type=jnp.float32)
                 + bl_ref[l])
        E_cur = E_new + E_cur                                                # residual

    e_out_ref[...] = E_cur
    # final: V_out = scatter_sum(E, edge_index[0] = src)  (one-time, kept in f32)
    v_out_ref[...] = jax.lax.dot_general(S_src, E_cur, contract_m,
                                         preferred_element_type=jnp.float32)


def chemprop_block(V, E, edge_index, rev_index, params):
    N, d_v = V.shape
    M, d_e = E.shape
    H = params["w_layers"].shape[-1]

    # Pad rows to multiples of 8 (sublane alignment). Padded edges get
    # src/dest = -1 (all-zero one-hot rows) and rev = self, so they never
    # contaminate real outputs; padded rows are sliced away on return.
    N_pad = -(-N // 8) * 8
    M_pad = -(-M // 8) * 8

    V_p = jnp.zeros((N_pad, d_v), V.dtype).at[:N].set(V)
    E_p = jnp.zeros((M_pad, d_e), E.dtype).at[:M].set(E)
    src = jnp.full((M_pad, 1), -1, jnp.int32).at[:M, 0].set(edge_index[0])
    dest = jnp.full((M_pad, 1), -1, jnp.int32).at[:M, 0].set(edge_index[1])
    rev = jnp.arange(M_pad, dtype=jnp.int32).at[:M].set(rev_index)

    vmem = lambda: pl.BlockSpec(memory_space=pltpu.MemorySpace.VMEM)
    smem = pl.BlockSpec(memory_space=pltpu.MemorySpace.SMEM)

    args = (V_p, E_p, src, dest, rev,
            params["w_node"], params["b_node"],
            params["w_edge"], params["b_edge"],
            params["w_layers"], params["b_layers"])
    in_specs = [vmem(), vmem(), vmem(), vmem(), smem] + [vmem() for _ in range(6)]

    e_out, v_out = pl.pallas_call(
        chemprop_kernel,
        out_shape=(jax.ShapeDtypeStruct((M_pad, H), jnp.float32),
                   jax.ShapeDtypeStruct((N_pad, H), jnp.float32)),
        in_specs=in_specs,
        out_specs=(vmem(), vmem()),
        scratch_shapes=[pltpu.VMEM((M_pad, H), jnp.float32),   # H_uv staging
                        pltpu.VMEM((M_pad, H), jnp.float32)],  # H_uv[rev] gather buffer
        compiler_params=pltpu.CompilerParams(vmem_limit_bytes=32 * 1024 * 1024),
    )(*args)
    return e_out[:M], v_out[:N]


def reference_forward(V, E, src, dest, rev_index, params, num_nodes):
    """Pure-JAX f32 reference mirroring the PyTorch semantics."""
    node_emb = V @ params["w_node"] + params["b_node"]
    E_cur = node_emb[src] + E @ params["w_edge"] + params["b_edge"]
    for l in range(DEPTH):
        H_uv = jnp.maximum(E_cur, 0.0)
        M_v = jax.ops.segment_sum(H_uv, dest, num_segments=num_nodes)
        M_uv = M_v[src] - H_uv[rev_index]
        E_cur = (M_uv @ params["w_layers"][l] + params["b_layers"][l]) + E_cur
    V_out = jax.ops.segment_sum(E_cur, src, num_segments=num_nodes)
    return E_cur, V_out


if __name__ == "__main__":
    # Small deterministic problem: 6 nodes, 4 undirected bonds -> 8 directed edges.
    # HIDDEN=128 keeps the hot-path lane dimension fully dense.
    N, M, D_V, D_E, HIDDEN = 6, 8, 16, 16, 128

    key = jax.random.PRNGKey(0)
    k_v, k_e, k_wn, k_bn, k_we, k_be, k_wl, k_bl = jax.random.split(key, 8)

    V = jax.random.normal(k_v, (N, D_V), dtype=jnp.float32)
    E = jax.random.normal(k_e, (M, D_E), dtype=jnp.float32)

    # directed edges stored as reverse pairs: (u->v, v->u), rev_index = i ^ 1
    und = [(0, 1), (1, 2), (2, 3), (3, 4)]
    src_list, dest_list = [], []
    for u, v in und:
        src_list += [u, v]
        dest_list += [v, u]
    edge_index = jnp.array([src_list, dest_list], dtype=jnp.int32)     # [2, M]
    rev_index = jnp.array([i ^ 1 for i in range(M)], dtype=jnp.int32)  # [M]

    params = {
        "w_node": 0.1 * jax.random.normal(k_wn, (D_V, HIDDEN), dtype=jnp.float32),
        "b_node": 0.1 * jax.random.normal(k_bn, (1, HIDDEN), dtype=jnp.float32),
        "w_edge": 0.1 * jax.random.normal(k_we, (D_E, HIDDEN), dtype=jnp.float32),
        "b_edge": 0.1 * jax.random.normal(k_be, (1, HIDDEN), dtype=jnp.float32),
        "w_layers": 0.1 * jax.random.normal(k_wl, (DEPTH, HIDDEN, HIDDEN), dtype=jnp.float32),
        "b_layers": 0.1 * jax.random.normal(k_bl, (DEPTH, 1, HIDDEN), dtype=jnp.float32),
    }

    e_out, v_out = chemprop_block(V, E, edge_index, rev_index, params)
    jax.block_until_ready((e_out, v_out))

    e_ref, v_ref = reference_forward(V, E, edge_index[0], edge_index[1],
                                     rev_index, params, N)
    # Hot-path matmuls run in bf16 with f32 accumulation -> loosened tolerance vs
    # the pure-f32 reference (observed error is far below this bound).
    assert jnp.allclose(e_out, e_ref, atol=5e-2, rtol=5e-2)
    assert jnp.allclose(v_out, v_ref, atol=5e-2, rtol=5e-2)

    print("KERNEL_OK")
</pallas_src>

<mosaic_0001>
module attributes {stable_mosaic.version = 11 : i64} {
  func.func @chemprop_kernel(%arg0: memref<8x16xf32, #tpu.memory_space<vmem>>, %arg1: memref<8x16xf32, #tpu.memory_space<vmem>>, %arg2: memref<8x1xi32, #tpu.memory_space<vmem>>, %arg3: memref<8x1xi32, #tpu.memory_space<vmem>>, %arg4: memref<8xi32, #tpu.memory_space<smem>>, %arg5: memref<16x128xf32, #tpu.memory_space<vmem>>, %arg6: memref<1x128xf32, #tpu.memory_space<vmem>>, %arg7: memref<16x128xf32, #tpu.memory_space<vmem>>, %arg8: memref<1x128xf32, #tpu.memory_space<vmem>>, %arg9: memref<3x128x128xf32, #tpu.memory_space<vmem>>, %arg10: memref<3x1x128xf32, #tpu.memory_space<vmem>>, %arg11: memref<8x128xf32, #tpu.memory_space<vmem>>, %arg12: memref<8x128xf32, #tpu.memory_space<vmem>>, %arg13: memref<8x128xf32, #tpu.memory_space<vmem>>, %arg14: memref<8x128xf32, #tpu.memory_space<vmem>>) attributes {dimension_semantics = [], scalar_prefetch = 0 : i64, scratch_operands = 2 : i64, tpu.core_type = #tpu.core_type<tc>} {
    %0 = tpu.iota {dimensions = array<i32: 1>} : vector<8x8xi32>
    %c0 = arith.constant 0 : index
    %c0_0 = arith.constant 0 : index
    %1 = vector.load %arg2[%c0, %c0_0] : memref<8x1xi32, #tpu.memory_space<vmem>>, vector<8x1xi32>
    %2 = vector.broadcast %1 : vector<8x1xi32> to vector<8x8xi32>
    %3 = arith.cmpi eq, %0, %2 : vector<8x8xi32>
    %4 = arith.extui %3 : vector<8x8xi1> to vector<8x8xi32>
    %5 = arith.sitofp %4 : vector<8x8xi32> to vector<8x8xf32>
    %6 = arith.truncf %5 : vector<8x8xf32> to vector<8x8xbf16>
    %c0_1 = arith.constant 0 : index
    %c0_2 = arith.constant 0 : index
    %7 = vector.load %arg3[%c0_1, %c0_2] : memref<8x1xi32, #tpu.memory_space<vmem>>, vector<8x1xi32>
    %8 = vector.broadcast %7 : vector<8x1xi32> to vector<8x8xi32>
    %9 = arith.cmpi eq, %0, %8 : vector<8x8xi32>
    %10 = arith.extui %9 : vector<8x8xi1> to vector<8x8xi32>
    %11 = arith.sitofp %10 : vector<8x8xi32> to vector<8x8xf32>
    %12 = arith.truncf %11 : vector<8x8xf32> to vector<8x8xbf16>
    %c0_3 = arith.constant 0 : index
    %c0_4 = arith.constant 0 : index
    %13 = vector.load %arg0[%c0_3, %c0_4] : memref<8x16xf32, #tpu.memory_space<vmem>>, vector<8x16xf32>
    %c0_5 = arith.constant 0 : index
    %c0_6 = arith.constant 0 : index
    %14 = vector.load %arg5[%c0_5, %c0_6] : memref<16x128xf32, #tpu.memory_space<vmem>>, vector<16x128xf32>
    %cst = arith.constant dense<0.000000e+00> : vector<8x128xf32>
    %15 = tpu.matmul %13, %14, %cst {dimension_numbers = #tpu.dot_dimension_numbers<[1], [0], [0], [1], [0, 0, 1, 1], [], []>} : vector<8x16xf32>, vector<16x128xf32>, vector<8x128xf32> -> vector<8x128xf32>
    %c0_7 = arith.constant 0 : index
    %c0_8 = arith.constant 0 : index
    %16 = vector.load %arg6[%c0_7, %c0_8] : memref<1x128xf32, #tpu.memory_space<vmem>>, vector<1x128xf32>
    %17 = vector.broadcast %16 : vector<1x128xf32> to vector<8x128xf32>
    %18 = arith.addf %15, %17 : vector<8x128xf32>
    %c0_9 = arith.constant 0 : index
    %c0_10 = arith.constant 0 : index
    %19 = vector.load %arg1[%c0_9, %c0_10] : memref<8x16xf32, #tpu.memory_space<vmem>>, vector<8x16xf32>
    %c0_11 = arith.constant 0 : index
    %c0_12 = arith.constant 0 : index
    %20 = vector.load %arg7[%c0_11, %c0_12] : memref<16x128xf32, #tpu.memory_space<vmem>>, vector<16x128xf32>
    %cst_13 = arith.constant dense<0.000000e+00> : vector<8x128xf32>
    %21 = tpu.matmul %19, %20, %cst_13 {dimension_numbers = #tpu.dot_dimension_numbers<[1], [0], [0], [1], [0, 0, 1, 1], [], []>} : vector<8x16xf32>, vector<16x128xf32>, vector<8x128xf32> -> vector<8x128xf32>
    %c0_14 = arith.constant 0 : index
    %c0_15 = arith.constant 0 : index
    %22 = vector.load %arg8[%c0_14, %c0_15] : memref<1x128xf32, #tpu.memory_space<vmem>>, vector<1x128xf32>
    %23 = vector.broadcast %22 : vector<1x128xf32> to vector<8x128xf32>
    %24 = arith.addf %21, %23 : vector<8x128xf32>
    %cst_16 = arith.constant dense<0.000000e+00> : vector<8x128xf32>
    %25 = tpu.matmul %5, %18, %cst_16 {dimension_numbers = #tpu.dot_dimension_numbers<[1], [0], [0], [1], [0, 0, 1, 1], [], []>} : vector<8x8xf32>, vector<8x128xf32>, vector<8x128xf32> -> vector<8x128xf32>
    %26 = arith.addf %25, %24 : vector<8x128xf32>
    %cst_17 = arith.constant 0.000000e+00 : f32
    %27 = vector.broadcast %cst_17 : f32 to vector<8x128xf32>
    %28 = arith.maximumf %26, %27 : vector<8x128xf32>
    %29 = arith.truncf %28 : vector<8x128xf32> to vector<8x128xbf16>
    %cst_18 = arith.constant dense<0.000000e+00> : vector<8x128xf32>
    %30 = tpu.matmul %12, %29, %cst_18 {dimension_numbers = #tpu.dot_dimension_numbers<[0], [0], [1], [1], [0, 1, 1, 1], [], []>} : vector<8x8xbf16>, vector<8x128xbf16>, vector<8x128xf32> -> vector<8x128xf32>
    %31 = arith.truncf %30 : vector<8x128xf32> to vector<8x128xbf16>
    %cst_19 = arith.constant dense<0.000000e+00> : vector<8x128xf32>
    %32 = tpu.matmul %6, %31, %cst_19 {dimension_numbers = #tpu.dot_dimension_numbers<[1], [0], [0], [1], [0, 0, 1, 1], [], []>} : vector<8x8xbf16>, vector<8x128xbf16>, vector<8x128xf32> -> vector<8x128xf32>
    %c0_20 = arith.constant 0 : index
    %c0_21 = arith.constant 0 : index
    %33 = vector.load %arg13[%c0_20, %c0_21] : memref<8x128xf32, #tpu.memory_space<vmem>>, vector<8x128xf32>
    tpu.vector_store %arg13[%c0_20, %c0_21], %28 {strides = array<i32>} : memref<8x128xf32, #tpu.memory_space<vmem>>, vector<8x128xf32>,
    %c0_i32 = arith.constant 0 : i32
    %34 = arith.index_cast %c0_i32 : i32 to index
    %35 = memref.load %arg4[%34] : memref<8xi32, #tpu.memory_space<smem>>
    %36 = arith.index_cast %35 : i32 to index
    %c0_22 = arith.constant 0 : index
    %37 = vector.load %arg13[%36, %c0_22] : memref<8x128xf32, #tpu.memory_space<vmem>>, vector<1x128xf32>
    %38 = arith.index_cast %c0_i32 : i32 to index
    %c0_23 = arith.constant 0 : index
    %39 = vector.load %arg14[%38, %c0_23] : memref<8x128xf32, #tpu.memory_space<vmem>>, vector<1x128xf32>
    tpu.vector_store %arg14[%38, %c0_23], %37 {strides = array<i32>} : memref<8x128xf32, #tpu.memory_space<vmem>>, vector<1x128xf32>,
    %c1_i32 = arith.constant 1 : i32
    %40 = arith.index_cast %c1_i32 : i32 to index
    %41 = memref.load %arg4[%40] : memref<8xi32, #tpu.memory_space<smem>>
    %42 = arith.index_cast %41 : i32 to index
    %c0_24 = arith.constant 0 : index
    %43 = vector.load %arg13[%42, %c0_24] : memref<8x128xf32, #tpu.memory_space<vmem>>, vector<1x128xf32>
    %44 = arith.index_cast %c1_i32 : i32 to index
    %c0_25 = arith.constant 0 : index
    %45 = vector.load %arg14[%44, %c0_25] : memref<8x128xf32, #tpu.memory_space<vmem>>, vector<1x128xf32>
    tpu.vector_store %arg14[%44, %c0_25], %43 {strides = array<i32>} : memref<8x128xf32, #tpu.memory_space<vmem>>, vector<1x128xf32>,
    %c2_i32 = arith.constant 2 : i32
    %46 = arith.index_cast %c2_i32 : i32 to index
    %47 = memref.load %arg4[%46] : memref<8xi32, #tpu.memory_space<smem>>
    %48 = arith.index_cast %47 : i32 to index
    %c0_26 = arith.constant 0 : index
    %49 = vector.load %arg13[%48, %c0_26] : memref<8x128xf32, #tpu.memory_space<vmem>>, vector<1x128xf32>
    %50 = arith.index_cast %c2_i32 : i32 to index
    %c0_27 = arith.constant 0 : index
    %51 = vector.load %arg14[%50, %c0_27] : memref<8x128xf32, #tpu.memory_space<vmem>>, vector<1x128xf32>
    tpu.vector_store %arg14[%50, %c0_27], %49 {strides = array<i32>} : memref<8x128xf32, #tpu.memory_space<vmem>>, vector<1x128xf32>,
    %c3_i32 = arith.constant 3 : i32
    %52 = arith.index_cast %c3_i32 : i32 to index
    %53 = memref.load %arg4[%52] : memref<8xi32, #tpu.memory_space<smem>>
    %54 = arith.index_cast %53 : i32 to index
    %c0_28 = arith.constant 0 : index
    %55 = vector.load %arg13[%54, %c0_28] : memref<8x128xf32, #tpu.memory_space<vmem>>, vector<1x128xf32>
    %56 = arith.index_cast %c3_i32 : i32 to index
    %c0_29 = arith.constant 0 : index
    %57 = vector.load %arg14[%56, %c0_29] : memref<8x128xf32, #tpu.memory_space<vmem>>, vector<1x128xf32>
    tpu.vector_store %arg14[%56, %c0_29], %55 {strides = array<i32>} : memref<8x128xf32, #tpu.memory_space<vmem>>, vector<1x128xf32>,
    %c4_i32 = arith.constant 4 : i32
    %58 = arith.index_cast %c4_i32 : i32 to index
    %59 = memref.load %arg4[%58] : memref<8xi32, #tpu.memory_space<smem>>
    %60 = arith.index_cast %59 : i32 to index
    %c0_30 = arith.constant 0 : index
    %61 = vector.load %arg13[%60, %c0_30] : memref<8x128xf32, #tpu.memory_space<vmem>>, vector<1x128xf32>
    %62 = arith.index_cast %c4_i32 : i32 to index
    %c0_31 = arith.constant 0 : index
    %63 = vector.load %arg14[%62, %c0_31] : memref<8x128xf32, #tpu.memory_space<vmem>>, vector<1x128xf32>
    tpu.vector_store %arg14[%62, %c0_31], %61 {strides = array<i32>} : memref<8x128xf32, #tpu.memory_space<vmem>>, vector<1x128xf32>,
    %c5_i32 = arith.constant 5 : i32
    %64 = arith.index_cast %c5_i32 : i32 to index
    %65 = memref.load %arg4[%64] : memref<8xi32, #tpu.memory_space<smem>>
    %66 = arith.index_cast %65 : i32 to index
    %c0_32 = arith.constant 0 : index
    %67 = vector.load %arg13[%66, %c0_32] : memref<8x128xf32, #tpu.memory_space<vmem>>, vector<1x128xf32>
    %68 = arith.index_cast %c5_i32 : i32 to index
    %c0_33 = arith.constant 0 : index
    %69 = vector.load %arg14[%68, %c0_33] : memref<8x128xf32, #tpu.memory_space<vmem>>, vector<1x128xf32>
    tpu.vector_store %arg14[%68, %c0_33], %67 {strides = array<i32>} : memref<8x128xf32, #tpu.memory_space<vmem>>, vector<1x128xf32>,
    %c6_i32 = arith.constant 6 : i32
    %70 = arith.index_cast %c6_i32 : i32 to index
    %71 = memref.load %arg4[%70] : memref<8xi32, #tpu.memory_space<smem>>
    %72 = arith.index_cast %71 : i32 to index
    %c0_34 = arith.constant 0 : index
    %73 = vector.load %arg13[%72, %c0_34] : memref<8x128xf32, #tpu.memory_space<vmem>>, vector<1x128xf32>
    %74 = arith.index_cast %c6_i32 : i32 to index
    %c0_35 = arith.constant 0 : index
    %75 = vector.load %arg14[%74, %c0_35] : memref<8x128xf32, #tpu.memory_space<vmem>>, vector<1x128xf32>
    tpu.vector_store %arg14[%74, %c0_35], %73 {strides = array<i32>} : memref<8x128xf32, #tpu.memory_space<vmem>>, vector<1x128xf32>,
    %c7_i32 = arith.constant 7 : i32
    %76 = arith.index_cast %c7_i32 : i32 to index
    %77 = memref.load %arg4[%76] : memref<8xi32, #tpu.memory_space<smem>>
    %78 = arith.index_cast %77 : i32 to index
    %c0_36 = arith.constant 0 : index
    %79 = vector.load %arg13[%78, %c0_36] : memref<8x128xf32, #tpu.memory_space<vmem>>, vector<1x128xf32>
    %80 = arith.index_cast %c7_i32 : i32 to index
    %c0_37 = arith.constant 0 : index
    %81 = vector.load %arg14[%80, %c0_37] : memref<8x128xf32, #tpu.memory_space<vmem>>, vector<1x128xf32>
    tpu.vector_store %arg14[%80, %c0_37], %79 {strides = array<i32>} : memref<8x128xf32, #tpu.memory_space<vmem>>, vector<1x128xf32>,
    %c8_i32 = arith.constant 8 : i32
    %c0_38 = arith.constant 0 : index
    %c0_39 = arith.constant 0 : index
    %82 = vector.load %arg14[%c0_38, %c0_39] : memref<8x128xf32, #tpu.memory_space<vmem>>, vector<8x128xf32>
    %83 = arith.subf %32, %82 : vector<8x128xf32>
    %84 = arith.truncf %83 : vector<8x128xf32> to vector<8x128xbf16>
    %c0_40 = arith.constant 0 : index
    %c0_41 = arith.constant 0 : index
    %c0_42 = arith.constant 0 : index
    %85 = vector.load %arg9[%c0_40, %c0_41, %c0_42] : memref<3x128x128xf32, #tpu.memory_space<vmem>>, vector<1x128x128xf32>
    %86 = vector.shape_cast %85 : vector<1x128x128xf32> to vector<128x128xf32>
    %87 = arith.truncf %86 : vector<128x128xf32> to vector<128x128xbf16>
    %cst_43 = arith.constant dense<0.000000e+00> : vector<8x128xf32>
    %88 = tpu.matmul %84, %87, %cst_43 {dimension_numbers = #tpu.dot_dimension_numbers<[1], [0], [0], [1], [0, 0, 1, 1], [], []>} : vector<8x128xbf16>, vector<128x128xbf16>, vector<8x128xf32> -> vector<8x128xf32>
    %c0_44 = arith.constant 0 : index
    %c0_45 = arith.constant 0 : index
    %c0_46 = arith.constant 0 : index
    %89 = vector.load %arg10[%c0_44, %c0_45, %c0_46] : memref<3x1x128xf32, #tpu.memory_space<vmem>>, vector<1x1x128xf32>
    %90 = vector.shape_cast %89 : vector<1x1x128xf32> to vector<1x128xf32>
    %91 = vector.broadcast %90 : vector<1x128xf32> to vector<8x128xf32>
    %92 = arith.addf %88, %91 : vector<8x128xf32>
    %93 = arith.addf %92, %26 : vector<8x128xf32>
    %cst_47 = arith.constant 0.000000e+00 : f32
    %94 = vector.broadcast %cst_47 : f32 to vector<8x128xf32>
    %95 = arith.maximumf %93, %94 : vector<8x128xf32>
    %96 = arith.truncf %95 : vector<8x128xf32> to vector<8x128xbf16>
    %cst_48 = arith.constant dense<0.000000e+00> : vector<8x128xf32>
    %97 = tpu.matmul %12, %96, %cst_48 {dimension_numbers = #tpu.dot_dimension_numbers<[0], [0], [1], [1], [0, 1, 1, 1], [], []>} : vector<8x8xbf16>, vector<8x128xbf16>, vector<8x128xf32> -> vector<8x128xf32>
    %98 = arith.truncf %97 : vector<8x128xf32> to vector<8x128xbf16>
    %cst_49 = arith.constant dense<0.000000e+00> : vector<8x128xf32>
    %99 = tpu.matmul %6, %98, %cst_49 {dimension_numbers = #tpu.dot_dimension_numbers<[1], [0], [0], [1], [0, 0, 1, 1], [], []>} : vector<8x8xbf16>, vector<8x128xbf16>, vector<8x128xf32> -> vector<8x128xf32>
    %c0_50 = arith.constant 0 : index
    %c0_51 = arith.constant 0 : index
    %100 = vector.load %arg13[%c0_50, %c0_51] : memref<8x128xf32, #tpu.memory_space<vmem>>, vector<8x128xf32>
    tpu.vector_store %arg13[%c0_50, %c0_51], %95 {strides = array<i32>} : memref<8x128xf32, #tpu.memory_space<vmem>>, vector<8x128xf32>,
    %c0_i32_52 = arith.constant 0 : i32
    %101 = arith.index_cast %c0_i32_52 : i32 to index
    %102 = memref.load %arg4[%101] : memref<8xi32, #tpu.memory_space<smem>>
    %103 = arith.index_cast %102 : i32 to index
    %c0_53 = arith.constant 0 : index
    %104 = vector.load %arg13[%103, %c0_53] : memref<8x128xf32, #tpu.memory_space<vmem>>, vector<1x128xf32>
    %105 = arith.index_cast %c0_i32_52 : i32 to index
    %c0_54 = arith.constant 0 : index
    %106 = vector.load %arg14[%105, %c0_54] : memref<8x128xf32, #tpu.memory_space<vmem>>, vector<1x128xf32>
    tpu.vector_store %arg14[%105, %c0_54], %104 {strides = array<i32>} : memref<8x128xf32, #tpu.memory_space<vmem>>, vector<1x128xf32>,
    %c1_i32_55 = arith.constant 1 : i32
    %107 = arith.index_cast %c1_i32_55 : i32 to index
    %108 = memref.load %arg4[%107] : memref<8xi32, #tpu.memory_space<smem>>
    %109 = arith.index_cast %108 : i32 to index
    %c0_56 = arith.constant 0 : index
    %110 = vector.load %arg13[%109, %c0_56] : memref<8x128xf32, #tpu.memory_space<vmem>>, vector<1x128xf32>
    %111 = arith.index_cast %c1_i32_55 : i32 to index
    %c0_57 = arith.constant 0 : index
    %112 = vector.load %arg14[%111, %c0_57] : memref<8x128xf32, #tpu.memory_space<vmem>>, vector<1x128xf32>
    tpu.vector_store %arg14[%111, %c0_57], %110 {strides = array<i32>} : memref<8x128xf32, #tpu.memory_space<vmem>>, vector<1x128xf32>,
    %c2_i32_58 = arith.constant 2 : i32
    %113 = arith.index_cast %c2_i32_58 : i32 to index
    %114 = memref.load %arg4[%113] : memref<8xi32, #tpu.memory_space<smem>>
    %115 = arith.index_cast %114 : i32 to index
    %c0_59 = arith.constant 0 : index
    %116 = vector.load %arg13[%115, %c0_59] : memref<8x128xf32, #tpu.memory_space<vmem>>, vector<1x128xf32>
    %117 = arith.index_cast %c2_i32_58 : i32 to index
    %c0_60 = arith.constant 0 : index
    %118 = vector.load %arg14[%117, %c0_60] : memref<8x128xf32, #tpu.memory_space<vmem>>, vector<1x128xf32>
    tpu.vector_store %arg14[%117, %c0_60], %116 {strides = array<i32>} : memref<8x128xf32, #tpu.memory_space<vmem>>, vector<1x128xf32>,
    %c3_i32_61 = arith.constant 3 : i32
    %119 = arith.index_cast %c3_i32_61 : i32 to index
    %120 = memref.load %arg4[%119] : memref<8xi32, #tpu.memory_space<smem>>
    %121 = arith.index_cast %120 : i32 to index
    %c0_62 = arith.constant 0 : index
    %122 = vector.load %arg13[%121, %c0_62] : memref<8x128xf32, #tpu.memory_space<vmem>>, vector<1x128xf32>
    %123 = arith.index_cast %c3_i32_61 : i32 to index
    %c0_63 = arith.constant 0 : index
    %124 = vector.load %arg14[%123, %c0_63] : memref<8x128xf32, #tpu.memory_space<vmem>>, vector<1x128xf32>
    tpu.vector_store %arg14[%123, %c0_63], %122 {strides = array<i32>} : memref<8x128xf32, #tpu.memory_space<vmem>>, vector<1x128xf32>,
    %c4_i32_64 = arith.constant 4 : i32
    %125 = arith.index_cast %c4_i32_64 : i32 to index
    %126 = memref.load %arg4[%125] : memref<8xi32, #tpu.memory_space<smem>>
    %127 = arith.index_cast %126 : i32 to index
    %c0_65 = arith.constant 0 : index
    %128 = vector.load %arg13[%127, %c0_65] : memref<8x128xf32, #tpu.memory_space<vmem>>, vector<1x128xf32>
    %129 = arith.index_cast %c4_i32_64 : i32 to index
    %c0_66 = arith.constant 0 : index
    %130 = vector.load %arg14[%129, %c0_66] : memref<8x128xf32, #tpu.memory_space<vmem>>, vector<1x128xf32>
    tpu.vector_store %arg14[%129, %c0_66], %128 {strides = array<i32>} : memref<8x128xf32, #tpu.memory_space<vmem>>, vector<1x128xf32>,
    %c5_i32_67 = arith.constant 5 : i32
    %131 = arith.index_cast %c5_i32_67 : i32 to index
    %132 = memref.load %arg4[%131] : memref<8xi32, #tpu.memory_space<smem>>
    %133 = arith.index_cast %132 : i32 to index
    %c0_68 = arith.constant 0 : index
    %134 = vector.load %arg13[%133, %c0_68] : memref<8x128xf32, #tpu.memory_space<vmem>>, vector<1x128xf32>
    %135 = arith.index_cast %c5_i32_67 : i32 to index
    %c0_69 = arith.constant 0 : index
    %136 = vector.load %arg14[%135, %c0_69] : memref<8x128xf32, #tpu.memory_space<vmem>>, vector<1x128xf32>
    tpu.vector_store %arg14[%135, %c0_69], %134 {strides = array<i32>} : memref<8x128xf32, #tpu.memory_space<vmem>>, vector<1x128xf32>,
    %c6_i32_70 = arith.constant 6 : i32
    %137 = arith.index_cast %c6_i32_70 : i32 to index
    %138 = memref.load %arg4[%137] : memref<8xi32, #tpu.memory_space<smem>>
    %139 = arith.index_cast %138 : i32 to index
    %c0_71 = arith.constant 0 : index
    %140 = vector.load %arg13[%139, %c0_71] : memref<8x128xf32, #tpu.memory_space<vmem>>, vector<1x128xf32>
    %141 = arith.index_cast %c6_i32_70 : i32 to index
    %c0_72 = arith.constant 0 : index
    %142 = vector.load %arg14[%141, %c0_72] : memref<8x128xf32, #tpu.memory_space<vmem>>, vector<1x128xf32>
    tpu.vector_store %arg14[%141, %c0_72], %140 {strides = array<i32>} : memref<8x128xf32, #tpu.memory_space<vmem>>, vector<1x128xf32>,
    %c7_i32_73 = arith.constant 7 : i32
    %143 = arith.index_cast %c7_i32_73 : i32 to index
    %144 = memref.load %arg4[%143] : memref<8xi32, #tpu.memory_space<smem>>
    %145 = arith.index_cast %144 : i32 to index
    %c0_74 = arith.constant 0 : index
    %146 = vector.load %arg13[%145, %c0_74] : memref<8x128xf32, #tpu.memory_space<vmem>>, vector<1x128xf32>
    %147 = arith.index_cast %c7_i32_73 : i32 to index
    %c0_75 = arith.constant 0 : index
    %148 = vector.load %arg14[%147, %c0_75] : memref<8x128xf32, #tpu.memory_space<vmem>>, vector<1x128xf32>
    tpu.vector_store %arg14[%147, %c0_75], %146 {strides = array<i32>} : memref<8x128xf32, #tpu.memory_space<vmem>>, vector<1x128xf32>,
    %c8_i32_76 = arith.constant 8 : i32
    %c0_77 = arith.constant 0 : index
    %c0_78 = arith.constant 0 : index
    %149 = vector.load %arg14[%c0_77, %c0_78] : memref<8x128xf32, #tpu.memory_space<vmem>>, vector<8x128xf32>
    %150 = arith.subf %99, %149 : vector<8x128xf32>
    %151 = arith.truncf %150 : vector<8x128xf32> to vector<8x128xbf16>
    %c1 = arith.constant 1 : index
    %c0_79 = arith.constant 0 : index
    %c0_80 = arith.constant 0 : index
    %152 = vector.load %arg9[%c1, %c0_79, %c0_80] : memref<3x128x128xf32, #tpu.memory_space<vmem>>, vector<1x128x128xf32>
    %153 = vector.shape_cast %152 : vector<1x128x128xf32> to vector<128x128xf32>
    %154 = arith.truncf %153 : vector<128x128xf32> to vector<128x128xbf16>
    %cst_81 = arith.constant dense<0.000000e+00> : vector<8x128xf32>
    %155 = tpu.matmul %151, %154, %cst_81 {dimension_numbers = #tpu.dot_dimension_numbers<[1], [0], [0], [1], [0, 0, 1, 1], [], []>} : vector<8x128xbf16>, vector<128x128xbf16>, vector<8x128xf32> -> vector<8x128xf32>
    %c1_82 = arith.constant 1 : index
    %c0_83 = arith.constant 0 : index
    %c0_84 = arith.constant 0 : index
    %156 = vector.load %arg10[%c1_82, %c0_83, %c0_84] : memref<3x1x128xf32, #tpu.memory_space<vmem>>, vector<1x1x128xf32>
    %157 = vector.shape_cast %156 : vector<1x1x128xf32> to vector<1x128xf32>
    %158 = vector.broadcast %157 : vector<1x128xf32> to vector<8x128xf32>
    %159 = arith.addf %155, %158 : vector<8x128xf32>
    %160 = arith.addf %159, %93 : vector<8x128xf32>
    %cst_85 = arith.constant 0.000000e+00 : f32
    %161 = vector.broadcast %cst_85 : f32 to vector<8x128xf32>
    %162 = arith.maximumf %160, %161 : vector<8x128xf32>
    %163 = arith.truncf %162 : vector<8x128xf32> to vector<8x128xbf16>
    %cst_86 = arith.constant dense<0.000000e+00> : vector<8x128xf32>
    %164 = tpu.matmul %12, %163, %cst_86 {dimension_numbers = #tpu.dot_dimension_numbers<[0], [0], [1], [1], [0, 1, 1, 1], [], []>} : vector<8x8xbf16>, vector<8x128xbf16>, vector<8x128xf32> -> vector<8x128xf32>
    %165 = arith.truncf %164 : vector<8x128xf32> to vector<8x128xbf16>
    %cst_87 = arith.constant dense<0.000000e+00> : vector<8x128xf32>
    %166 = tpu.matmul %6, %165, %cst_87 {dimension_numbers = #tpu.dot_dimension_numbers<[1], [0], [0], [1], [0, 0, 1, 1], [], []>} : vector<8x8xbf16>, vector<8x128xbf16>, vector<8x128xf32> -> vector<8x128xf32>
    %c0_88 = arith.constant 0 : index
    %c0_89 = arith.constant 0 : index
    %167 = vector.load %arg13[%c0_88, %c0_89] : memref<8x128xf32, #tpu.memory_space<vmem>>, vector<8x128xf32>
    tpu.vector_store %arg13[%c0_88, %c0_89], %162 {strides = array<i32>} : memref<8x128xf32, #tpu.memory_space<vmem>>, vector<8x128xf32>,
    %c0_i32_90 = arith.constant 0 : i32
    %168 = arith.index_cast %c0_i32_90 : i32 to index
    %169 = memref.load %arg4[%168] : memref<8xi32, #tpu.memory_space<smem>>
    %170 = arith.index_cast %169 : i32 to index
    %c0_91 = arith.constant 0 : index
    %171 = vector.load %arg13[%170, %c0_91] : memref<8x128xf32, #tpu.memory_space<vmem>>, vector<1x128xf32>
    %172 = arith.index_cast %c0_i32_90 : i32 to index
    %c0_92 = arith.constant 0 : index
    %173 = vector.load %arg14[%172, %c0_92] : memref<8x128xf32, #tpu.memory_space<vmem>>, vector<1x128xf32>
    tpu.vector_store %arg14[%172, %c0_92], %171 {strides = array<i32>} : memref<8x128xf32, #tpu.memory_space<vmem>>, vector<1x128xf32>,
    %c1_i32_93 = arith.constant 1 : i32
    %174 = arith.index_cast %c1_i32_93 : i32 to index
    %175 = memref.load %arg4[%174] : memref<8xi32, #tpu.memory_space<smem>>
    %176 = arith.index_cast %175 : i32 to index
    %c0_94 = arith.constant 0 : index
    %177 = vector.load %arg13[%176, %c0_94] : memref<8x128xf32, #tpu.memory_space<vmem>>, vector<1x128xf32>
    %178 = arith.index_cast %c1_i32_93 : i32 to index
    %c0_95 = arith.constant 0 : index
    %179 = vector.load %arg14[%178, %c0_95] : memref<8x128xf32, #tpu.memory_space<vmem>>, vector<1x128xf32>
    tpu.vector_store %arg14[%178, %c0_95], %177 {strides = array<i32>} : memref<8x128xf32, #tpu.memory_space<vmem>>, vector<1x128xf32>,
    %c2_i32_96 = arith.constant 2 : i32
    %180 = arith.index_cast %c2_i32_96 : i32 to index
    %181 = memref.load %arg4[%180] : memref<8xi32, #tpu.memory_space<smem>>
    %182 = arith.index_cast %181 : i32 to index
    %c0_97 = arith.constant 0 : index
    %183 = vector.load %arg13[%182, %c0_97] : memref<8x128xf32, #tpu.memory_space<vmem>>, vector<1x128xf32>
    %184 = arith.index_cast %c2_i32_96 : i32 to index
    %c0_98 = arith.constant 0 : index
    %185 = vector.load %arg14[%184, %c0_98] : memref<8x128xf32, #tpu.memory_space<vmem>>, vector<1x128xf32>
    tpu.vector_store %arg14[%184, %c0_98], %183 {strides = array<i32>} : memref<8x128xf32, #tpu.memory_space<vmem>>, vector<1x128xf32>,
    %c3_i32_99 = arith.constant 3 : i32
    %186 = arith.index_cast %c3_i32_99 : i32 to index
    %187 = memref.load %arg4[%186] : memref<8xi32, #tpu.memory_space<smem>>
    %188 = arith.index_cast %187 : i32 to index
    %c0_100 = arith.constant 0 : index
    %189 = vector.load %arg13[%188, %c0_100] : memref<8x128xf32, #tpu.memory_space<vmem>>, vector<1x128xf32>
    %190 = arith.index_cast %c3_i32_99 : i32 to index
    %c0_101 = arith.constant 0 : index
    %191 = vector.load %arg14[%190, %c0_101] : memref<8x128xf32, #tpu.memory_space<vmem>>, vector<1x128xf32>
    tpu.vector_store %arg14[%190, %c0_101], %189 {strides = array<i32>} : memref<8x128xf32, #tpu.memory_space<vmem>>, vector<1x128xf32>,
    %c4_i32_102 = arith.constant 4 : i32
    %192 = arith.index_cast %c4_i32_102 : i32 to index
    %193 = memref.load %arg4[%192] : memref<8xi32, #tpu.memory_space<smem>>
    %194 = arith.index_cast %193 : i32 to index
    %c0_103 = arith.constant 0 : index
    %195 = vector.load %arg13[%194, %c0_103] : memref<8x128xf32, #tpu.memory_space<vmem>>, vector<1x128xf32>
    %196 = arith.index_cast %c4_i32_102 : i32 to index
    %c0_104 = arith.constant 0 : index
    %197 = vector.load %arg14[%196, %c0_104] : memref<8x128xf32, #tpu.memory_space<vmem>>, vector<1x128xf32>
    tpu.vector_store %arg14[%196, %c0_104], %195 {strides = array<i32>} : memref<8x128xf32, #tpu.memory_space<vmem>>, vector<1x128xf32>,
    %c5_i32_105 = arith.constant 5 : i32
    %198 = arith.index_cast %c5_i32_105 : i32 to index
    %199 = memref.load %arg4[%198] : memref<8xi32, #tpu.memory_space<smem>>
    %200 = arith.index_cast %199 : i32 to index
    %c0_106 = arith.constant 0 : index
    %201 = vector.load %arg13[%200, %c0_106] : memref<8x128xf32, #tpu.memory_space<vmem>>, vector<1x128xf32>
    %202 = arith.index_cast %c5_i32_105 : i32 to index
    %c0_107 = arith.constant 0 : index
    %203 = vector.load %arg14[%202, %c0_107] : memref<8x128xf32, #tpu.memory_space<vmem>>, vector<1x128xf32>
    tpu.vector_store %arg14[%202, %c0_107], %201 {strides = array<i32>} : memref<8x128xf32, #tpu.memory_space<vmem>>, vector<1x128xf32>,
    %c6_i32_108 = arith.constant 6 : i32
    %204 = arith.index_cast %c6_i32_108 : i32 to index
    %205 = memref.load %arg4[%204] : memref<8xi32, #tpu.memory_space<smem>>
    %206 = arith.index_cast %205 : i32 to index
    %c0_109 = arith.constant 0 : index
    %207 = vector.load %arg13[%206, %c0_109] : memref<8x128xf32, #tpu.memory_space<vmem>>, vector<1x128xf32>
    %208 = arith.index_cast %c6_i32_108 : i32 to index
    %c0_110 = arith.constant 0 : index
    %209 = vector.load %arg14[%208, %c0_110] : memref<8x128xf32, #tpu.memory_space<vmem>>, vector<1x128xf32>
    tpu.vector_store %arg14[%208, %c0_110], %207 {strides = array<i32>} : memref<8x128xf32, #tpu.memory_space<vmem>>, vector<1x128xf32>,
    %c7_i32_111 = arith.constant 7 : i32
    %210 = arith.index_cast %c7_i32_111 : i32 to index
    %211 = memref.load %arg4[%210] : memref<8xi32, #tpu.memory_space<smem>>
    %212 = arith.index_cast %211 : i32 to index
    %c0_112 = arith.constant 0 : index
    %213 = vector.load %arg13[%212, %c0_112] : memref<8x128xf32, #tpu.memory_space<vmem>>, vector<1x128xf32>
    %214 = arith.index_cast %c7_i32_111 : i32 to index
    %c0_113 = arith.constant 0 : index
    %215 = vector.load %arg14[%214, %c0_113] : memref<8x128xf32, #tpu.memory_space<vmem>>, vector<1x128xf32>
    tpu.vector_store %arg14[%214, %c0_113], %213 {strides = array<i32>} : memref<8x128xf32, #tpu.memory_space<vmem>>, vector<1x128xf32>,
    %c8_i32_114 = arith.constant 8 : i32
    %c0_115 = arith.constant 0 : index
    %c0_116 = arith.constant 0 : index
    %216 = vector.load %arg14[%c0_115, %c0_116] : memref<8x128xf32, #tpu.memory_space<vmem>>, vector<8x128xf32>
    %217 = arith.subf %166, %216 : vector<8x128xf32>
    %218 = arith.truncf %217 : vector<8x128xf32> to vector<8x128xbf16>
    %c2 = arith.constant 2 : index
    %c0_117 = arith.constant 0 : index
    %c0_118 = arith.constant 0 : index
    %219 = vector.load %arg9[%c2, %c0_117, %c0_118] : memref<3x128x128xf32, #tpu.memory_space<vmem>>, vector<1x128x128xf32>
    %220 = vector.shape_cast %219 : vector<1x128x128xf32> to vector<128x128xf32>
    %221 = arith.truncf %220 : vector<128x128xf32> to vector<128x128xbf16>
    %cst_119 = arith.constant dense<0.000000e+00> : vector<8x128xf32>
    %222 = tpu.matmul %218, %221, %cst_119 {dimension_numbers = #tpu.dot_dimension_numbers<[1], [0], [0], [1], [0, 0, 1, 1], [], []>} : vector<8x128xbf16>, vector<128x128xbf16>, vector<8x128xf32> -> vector<8x128xf32>
    %c2_120 = arith.constant 2 : index
    %c0_121 = arith.constant 0 : index
    %c0_122 = arith.constant 0 : index
    %223 = vector.load %arg10[%c2_120, %c0_121, %c0_122] : memref<3x1x128xf32, #tpu.memory_space<vmem>>, vector<1x1x128xf32>
    %224 = vector.shape_cast %223 : vector<1x1x128xf32> to vector<1x128xf32>
    %225 = vector.broadcast %224 : vector<1x128xf32> to vector<8x128xf32>
    %226 = arith.addf %222, %225 : vector<8x128xf32>
    %227 = arith.addf %226, %160 : vector<8x128xf32>
    %c0_123 = arith.constant 0 : index
    %c0_124 = arith.constant 0 : index
    %228 = vector.load %arg11[%c0_123, %c0_124] : memref<8x128xf32, #tpu.memory_space<vmem>>, vector<8x128xf32>
    tpu.vector_store %arg11[%c0_123, %c0_124], %227 {strides = array<i32>} : memref<8x128xf32, #tpu.memory_space<vmem>>, vector<8x128xf32>,
    %cst_125 = arith.constant dense<0.000000e+00> : vector<8x128xf32>
    %229 = tpu.matmul %5, %227, %cst_125 {dimension_numbers = #tpu.dot_dimension_numbers<[0], [0], [1], [1], [0, 1, 1, 1], [], []>} : vector<8x8xf32>, vector<8x128xf32>, vector<8x128xf32> -> vector<8x128xf32>
    %c0_126 = arith.constant 0 : index
    %c0_127 = arith.constant 0 : index
    %230 = vector.load %arg12[%c0_126, %c0_127] : memref<8x128xf32, #tpu.memory_space<vmem>>, vector<8x128xf32>
    tpu.vector_store %arg12[%c0_126, %c0_127], %229 {strides = array<i32>} : memref<8x128xf32, #tpu.memory_space<vmem>>, vector<8x128xf32>,
    return
  }
}

</mosaic_0001>

<llo_original>
// kernel: tpu_custom_call.1
$region0: #{tpu_custom_call.1}
  #allocation0 [shape = 'u32[]', space=smem, size = 0x4, offset = 0x4, fixed_abs, tag = 'smem constant byte address 0x4 - core index']
  #allocation1 [shape = 'u32[144,128]{1,0:T(1,128)}', space=vmem, size = 0x12000, scoped, tag = 'internal scratch']
  #allocation2 [shape = 'f32[8,128]{1,0:T(8,128)}', space=vmem, size = 0x1000, scoped, tag = 'scratch operand']
  #allocation3 [shape = 'f32[8,128]{1,0:T(8,128)}', space=vmem, size = 0x1000, scoped, tag = 'scratch operand']
  %s0 = inlined_call_operand.hbm [shape: f32[8,16], index: 0, kind: input, shape index: {}]
  %s1 = inlined_call_operand.hbm [shape: f32[8,16], index: 1, kind: input, shape index: {}]
  %s2 = inlined_call_operand.vmem [shape: s32[8,1], index: 2, kind: input, shape index: {}]
  %s3 = inlined_call_operand.vmem [shape: s32[8,1], index: 3, kind: input, shape index: {}]
  %s4 = inlined_call_operand.vmem [shape: s32[8], index: 4, kind: input, shape index: {}]
  %s5 = inlined_call_operand.vmem [shape: f32[16,128], index: 5, kind: input, shape index: {}]
  %s6 = inlined_call_operand.vmem [shape: f32[1,128], index: 6, kind: input, shape index: {}]
  %s7 = inlined_call_operand.vmem [shape: f32[16,128], index: 7, kind: input, shape index: {}]
  %s8 = inlined_call_operand.vmem [shape: f32[1,128], index: 8, kind: input, shape index: {}]
  %s9 = inlined_call_operand.hbm [shape: f32[3,128,128], index: 9, kind: input, shape index: {}]
  %s10 = inlined_call_operand.vmem [shape: f32[3,1,128], index: 10, kind: input, shape index: {}]
  %s11 = inlined_call_operand.hbm [shape: f32[8,128], index: 11, kind: output, shape index: {0}]
  %s12 = inlined_call_operand.hbm [shape: f32[8,128], index: 12, kind: output, shape index: {1}]
  %13 = xla_tuple %s11, %s12
  %s14 = sld [smem:[#allocation0]]
  $region78: #{tpu_custom_call.1} parent=0
    _
  %s16 = ssub.s32 1, %s14
  %s17 = scalar_select 0, %s16, %s14
  $region1: #{tpu_custom_call.1} parent=0
    #allocation4 [shape = 'u8[4096]{0}', space=vmem, size = 0x1000, scoped, tag = 'input window, operand 0, single buffered']
    #allocation5 [shape = 's32[1]{0}', space=sflag, size = 0x4, scoped, tag = 'scoped memory for tpu_custom_call.1']
    #allocation6 [shape = 's32[1]{0}', space=sflag, size = 0x4, scoped, tag = 'scoped memory for tpu_custom_call.1']
    #allocation7 [shape = 's32[1]{0}', space=sflag, size = 0x4, scoped, tag = 'scoped memory for tpu_custom_call.1']
    #allocation8 [shape = 'u8[4096]{0}', space=vmem, size = 0x1000, scoped, tag = 'input window, operand 1, single buffered']
    #allocation9 [shape = 's32[1]{0}', space=sflag, size = 0x4, scoped, tag = 'scoped memory for tpu_custom_call.1']
    #allocation10 [shape = 'u8[512]{0}', space=smem, size = 0x200, scoped, tag = 'input window, operand 4, single buffered']
    #allocation11 [shape = 'u8[196608]{0}', space=vmem, size = 0x30000, scoped, tag = 'input window, operand 9, single buffered']
    #allocation12 [shape = 'u8[4096]{0}', space=vmem, size = 0x1000, scoped, tag = 'output window, operand 0, single buffered']
    #allocation13 [shape = 'u8[4096]{0}', space=vmem, size = 0x1000, scoped, tag = 'output window, operand 1, single buffered']
    #allocation14 [shape = 's32[1]{0}', space=sflag, size = 0x4, scoped, tag = 'scoped memory for tpu_custom_call.1']
    %18 = vsyncpa [#allocation5], 0
    %19 = vsyncpa [#allocation9], 0
    %20 = vsyncpa [#allocation7], 0
    %21 = vsyncpa [#allocation6], 0
    %22 = vsyncpa [#allocation14], 0
    // Predicated region
    $region2: #{tpu_custom_call.1} parent=1 // pred_check
      _
    $region3: #{tpu_custom_call.1} parent=1 // pred_check_branch
      %24 = sbr.rel (0) target = $region5
    $region4: #{tpu_custom_call.1} parent=1 // pred_region
      %s26 = ssub.s32 128, 128
      %27 = vsyncadd [#allocation5], %s26
      %s29 = sshll.u32 [#allocation4], 4
      %s30 = int_to_ptr.vmem [resolvable:$true] %s29
      %32 = dma.hbm_to_vmem [thread:$0]  %s0, 128, %s30, [#allocation5]
    $region5: #{tpu_custom_call.1} parent=1 // pred_fallthru
      _
    // Predicated region
    $region6: #{tpu_custom_call.1} parent=1 // pred_check
      _
    $region7: #{tpu_custom_call.1} parent=1 // pred_check_branch
      %34 = sbr.rel (0) target = $region9
    $region8: #{tpu_custom_call.1} parent=1 // pred_region
      %s36 = ssub.s32 128, 128
      %37 = vsyncadd [#allocation9], %s36
      %s39 = sshll.u32 [#allocation8], 4
      %s40 = int_to_ptr.vmem [resolvable:$true] %s39
      %42 = dma.hbm_to_vmem [thread:$0]  %s1, 128, %s40, [#allocation9]
    $region9: #{tpu_custom_call.1} parent=1 // pred_fallthru
      _
    // Predicated region
    $region10: #{tpu_custom_call.1} parent=1 // pred_check
      _
    $region11: #{tpu_custom_call.1} parent=1 // pred_check_branch
      %44 = sbr.rel (0) target = $region13
    $region12: #{tpu_custom_call.1} parent=1 // pred_region
      _
    $region13: #{tpu_custom_call.1} parent=1 // pred_fallthru
      _
    // Predicated region
    $region14: #{tpu_custom_call.1} parent=1 // pred_check
      _
    $region15: #{tpu_custom_call.1} parent=1 // pred_check_branch
      %46 = sbr.rel (0) target = $region17
    $region16: #{tpu_custom_call.1} parent=1 // pred_region
      _
    $region17: #{tpu_custom_call.1} parent=1 // pred_fallthru
      _
    // Predicated region
    $region18: #{tpu_custom_call.1} parent=1 // pred_check
      _
    $region19: #{tpu_custom_call.1} parent=1 // pred_check_branch
      %48 = sbr.rel (0) target = $region21
    $region20: #{tpu_custom_call.1} parent=1 // pred_region
      %s50 = ssub.s32 16, 16
      %51 = vsyncadd [#allocation7], %s50
      %s53 = sshll.u32 %s4, 4
      %s54 = int_to_ptr.vmem [resolvable:$true] %s53
      %56 = dma.vmem_to_smem %s54, 16, [#allocation10], [#allocation7]
    $region21: #{tpu_custom_call.1} parent=1 // pred_fallthru
      _
    // Predicated region
    $region22: #{tpu_custom_call.1} parent=1 // pred_check
      _
    $region23: #{tpu_custom_call.1} parent=1 // pred_check_branch
      %58 = sbr.rel (0) target = $region25
    $region24: #{tpu_custom_call.1} parent=1 // pred_region
      _
    $region25: #{tpu_custom_call.1} parent=1 // pred_fallthru
      _
    // Predicated region
    $region26: #{tpu_custom_call.1} parent=1 // pred_check
      _
    $region27: #{tpu_custom_call.1} parent=1 // pred_check_branch
      %60 = sbr.rel (0) target = $region29
    $region28: #{tpu_custom_call.1} parent=1 // pred_region
      _
    $region29: #{tpu_custom_call.1} parent=1 // pred_fallthru
      _
    // Predicated region
    $region30: #{tpu_custom_call.1} parent=1 // pred_check
      _
    $region31: #{tpu_custom_call.1} parent=1 // pred_check_branch
      %62 = sbr.rel (0) target = $region33
    $region32: #{tpu_custom_call.1} parent=1 // pred_region
      _
    $region33: #{tpu_custom_call.1} parent=1 // pred_fallthru
      _
    // Predicated region
    $region34: #{tpu_custom_call.1} parent=1 // pred_check
      _
    $region35: #{tpu_custom_call.1} parent=1 // pred_check_branch
      %64 = sbr.rel (0) target = $region37
    $region36: #{tpu_custom_call.1} parent=1 // pred_region
      _
    $region37: #{tpu_custom_call.1} parent=1 // pred_fallthru
      _
    // Predicated region
    $region38: #{tpu_custom_call.1} parent=1 // pred_check
      _
    $region39: #{tpu_custom_call.1} parent=1 // pred_check_branch
      %66 = sbr.rel (0) target = $region41
    $region40: #{tpu_custom_call.1} parent=1 // pred_region
      %s68 = ssub.s32 6144, 6144
      %69 = vsyncadd [#allocation9], %s68
      %s70 = sshll.u32 [#allocation11], 4
      %s71 = int_to_ptr.vmem [resolvable:$true] %s70
      %76 = dma.hbm_to_vmem [thread:$0]  %s9, 6144, %s71, [#allocation9], 128, 128, 8
    $region41: #{tpu_custom_call.1} parent=1 // pred_fallthru
      _
    // Predicated region
    $region42: #{tpu_custom_call.1} parent=1 // pred_check
      _
    $region43: #{tpu_custom_call.1} parent=1 // pred_check_branch
      %78 = sbr.rel (0) target = $region45
    $region44: #{tpu_custom_call.1} parent=1 // pred_region
      _
    $region45: #{tpu_custom_call.1} parent=1 // pred_fallthru
      _
    // Predicated region
    $region46: #{tpu_custom_call.1} parent=1 // pred_check
      _
    $region47: #{tpu_custom_call.1} parent=1 // pred_check_branch
      %80 = sbr.rel (0) target = $region49
    $region48: #{tpu_custom_call.1} parent=1 // pred_region
      %81 = dma.done [#allocation5], 128
    $region49: #{tpu_custom_call.1} parent=1 // pred_fallthru
      _
    // Predicated region
    $region50: #{tpu_custom_call.1} parent=1 // pred_check
      _
    $region51: #{tpu_custom_call.1} parent=1 // pred_check_branch
      %83 = sbr.rel (0) target = $region53
    $region52: #{tpu_custom_call.1} parent=1 // pred_region
      %84 = dma.done [#allocation9], 128
    $region53: #{tpu_custom_call.1} parent=1 // pred_fallthru
      _
    // Predicated region
    $region54: #{tpu_custom_call.1} parent=1 // pred_check
      _
    $region55: #{tpu_custom_call.1} parent=1 // pred_check_branch
      %86 = sbr.rel (0) target = $region57
    $region56: #{tpu_custom_call.1} parent=1 // pred_region
      %87 = dma.done [#allocation7], 16
    $region57: #{tpu_custom_call.1} parent=1 // pred_fallthru
      _
    // Predicated region
    $region58: #{tpu_custom_call.1} parent=1 // pred_check
      _
    $region59: #{tpu_custom_call.1} parent=1 // pred_check_branch
      %89 = sbr.rel (0) target = $region61
    $region60: #{tpu_custom_call.1} parent=1 // pred_region
      %90 = dma.done [#allocation9], 6144
    $region61: #{tpu_custom_call.1} parent=1 // pred_fallthru
      _
    %91 = sfence
    %v93 = vlaneseq
    %v94 = vand.u32 %v93, 127
    %v95 = vld [vmem:[%s2] sm:$0xff]
    %96 = vset.pattern.permute.xlu0 0
    %97 = vperm.xlu0 %96, %v95
    %v98 = vpop.permute.xlu0 %97
    %vm99 = vcmp.eq.s32.totalorder %v94, %v98
    %v100 = vsel %vm99, 1, 0
    %v101 = vcvt.s32.f32 %v100
    %v102 = vpack.c.bf16 %v101, %v101
    %v103 = vld [vmem:[%s3] sm:$0xff]
    %104 = vset.pattern.permute.xlu0 0
    %105 = vperm.xlu0 %104, %v103
    %v106 = vpop.permute.xlu0 %105
    %vm107 = vcmp.eq.s32.totalorder %v94, %v106
    %v108 = vsel %vm107, 1, 0
    %v109 = vcvt.s32.f32 %v108
    %v110 = vpack.c.bf16 %v109, %v109
    %v111 = vld [vmem:[#allocation4] sm:$0xff]
    %v112 = vld [vmem:[%s5] sm:$0xff]
    %v113 = vld [vmem:[%s5 + $0x8] sm:$0xff]
    %v114 = vld [vmem:[%s6] sm:$0x1]
    %v116 = vlaneseq
    %v117 = vshrl.u32 %v116, 7
    %v118 = vsub.s32 0, %v117
    %v119 = vrot.slane %v114, %v118
    %vm121 = vcmask 130048
    %v123 = vsel %vm121, %v111, 0
    %125 = vmatprep.subr.mxu0 0.0
    %126 = vmatpush1.msra.mxu0 %v112
    %127 = vmatprep.subr.mxu0 0.0
    %128 = vmatpush1.msra.mxu0 %v113
    %129 = vmatprep.subr.mxu0 0.0
    %130 = vmatpush1.msra.mxu0 0.0
    %131 = vmatprep.subr.mxu0 0.0
    %132 = vmatpush1.msra.mxu0 0.0
    %133 = vmatprep.subr.mxu0 0.0
    %134 = vmatpush1.msra.mxu0 0.0
    %135 = vmatprep.subr.mxu0 0.0
    %136 = vmatpush1.msra.mxu0 0.0
    %137 = vmatprep.subr.mxu0 0.0
    %138 = vmatpush1.msra.mxu0 0.0
    %139 = vmatprep.subr.mxu0 0.0
    %140 = vmatpush1.msra.mxu0 0.0
    %141 = vmatprep.subr.mxu0 0.0
    %142 = vmatpush1.msra.mxu0 0.0
    %143 = vmatprep.subr.mxu0 0.0
    %144 = vmatpush1.msra.mxu0 0.0
    %145 = vmatprep.subr.mxu0 0.0
    %146 = vmatpush1.msra.mxu0 0.0
    %147 = vmatprep.subr.mxu0 0.0
    %148 = vmatpush1.msra.mxu0 0.0
    %149 = vmatprep.subr.mxu0 0.0
    %150 = vmatpush1.msra.mxu0 0.0
    %151 = vmatprep.subr.mxu0 0.0
    %152 = vmatpush1.msra.mxu0 0.0
    %153 = vmatprep.subr.mxu0 0.0
    %154 = vmatpush1.msra.mxu0 0.0
    %155 = vmatprep.subr.mxu0 0.0
    %156 = vmatpush1.msra.mxu0 0.0
    %157 = vmatprep.subr.mxu0 0.0
    %158 = vmatpush1.msra.mxu0 0.0
    %159 = vmatprep.subr.mxu0 0.0
    %160 = vmatpush1.msra.mxu0 0.0
    %161 = vmatprep.subr.mxu0 0.0
    %162 = vmatpush1.msra.mxu0 0.0
    %163 = vmatprep.subr.mxu0 0.0
    %164 = vmatpush1.msra.mxu0 0.0
    %165 = vmatprep.subr.mxu0 0.0
    %166 = vmatpush1.msra.mxu0 0.0
    %167 = vmatprep.subr.mxu0 0.0
    %168 = vmatpush1.msra.mxu0 0.0
    %169 = vmatprep.subr.mxu0 0.0
    %170 = vmatpush1.msra.mxu0 0.0
    %171 = vmatprep.subr.mxu0 0.0
    %172 = vmatpush1.msra.mxu0 0.0
    %173 = vmatprep.subr.mxu0 0.0
    %174 = vmatpush1.msra.mxu0 0.0
    %175 = vmatprep.subr.mxu0 0.0
    %176 = vmatpush1.msra.mxu0 0.0
    %177 = vmatprep.subr.mxu0 0.0
    %178 = vmatpush1.msra.mxu0 0.0
    %179 = vmatprep.subr.mxu0 0.0
    %180 = vmatpush1.msra.mxu0 0.0
    %181 = vmatprep.subr.mxu0 0.0
    %182 = vmatpush1.msra.mxu0 0.0
    %183 = vmatprep.subr.mxu0 0.0
    %184 = vmatpush1.msra.mxu0 0.0
    %185 = vmatprep.subr.mxu0 0.0
    %186 = vmatpush1.msra.mxu0 0.0
    %187 = vmatprep.subr.mxu0 0.0
    %188 = vmatpush1.msra.mxu0 0.0
    %189 = vmatprep.mubr.f32.mxu0 0.0
    %190 = vmatmul.mubr.f32.gmra.mrb[0].mxu0 %v123
    %v191 = vpop.f32.mrb[0].mxu0
    %v192 = vadd.f32 %v119, %v191
    %v193 = vpop.f32.mrb[0].mxu0
    %194 = vdwg.mxu0
    %v195 = vld [vmem:[#allocation8] sm:$0xff]
    %v196 = vld [vmem:[%s7] sm:$0xff]
    %v197 = vld [vmem:[%s7 + $0x8] sm:$0xff]
    %v198 = vld [vmem:[%s8] sm:$0x1]
    %v200 = vlaneseq
    %v201 = vshrl.u32 %v200, 7
    %v202 = vsub.s32 0, %v201
    %v203 = vrot.slane %v198, %v202
    %v206 = vsel %vm121, %v195, 0
    %208 = vmatprep.subr.mxu0 0.0
    %209 = vmatpush1.msra.mxu0 %v196
    %210 = vmatprep.subr.mxu0 0.0
    %211 = vmatpush1.msra.mxu0 %v197
    %212 = vmatprep.subr.mxu0 0.0
    %213 = vmatpush1.msra.mxu0 0.0
    %214 = vmatprep.subr.mxu0 0.0
    %215 = vmatpush1.msra.mxu0 0.0
    %216 = vmatprep.subr.mxu0 0.0
    %217 = vmatpush1.msra.mxu0 0.0
    %218 = vmatprep.subr.mxu0 0.0
    %219 = vmatpush1.msra.mxu0 0.0
    %220 = vmatprep.subr.mxu0 0.0
    %221 = vmatpush1.msra.mxu0 0.0
    %222 = vmatprep.subr.mxu0 0.0
    %223 = vmatpush1.msra.mxu0 0.0
    %224 = vmatprep.subr.mxu0 0.0
    %225 = vmatpush1.msra.mxu0 0.0
    %226 = vmatprep.subr.mxu0 0.0
    %227 = vmatpush1.msra.mxu0 0.0
    %228 = vmatprep.subr.mxu0 0.0
    %229 = vmatpush1.msra.mxu0 0.0
    %230 = vmatprep.subr.mxu0 0.0
    %231 = vmatpush1.msra.mxu0 0.0
    %232 = vmatprep.subr.mxu0 0.0
    %233 = vmatpush1.msra.mxu0 0.0
    %234 = vmatprep.subr.mxu0 0.0
    %235 = vmatpush1.msra.mxu0 0.0
    %236 = vmatprep.subr.mxu0 0.0
    %237 = vmatpush1.msra.mxu0 0.0
    %238 = vmatprep.subr.mxu0 0.0
    %239 = vmatpush1.msra.mxu0 0.0
    %240 = vmatprep.subr.mxu0 0.0
    %241 = vmatpush1.msra.mxu0 0.0
    %242 = vmatprep.subr.mxu0 0.0
    %243 = vmatpush1.msra.mxu0 0.0
    %244 = vmatprep.subr.mxu0 0.0
    %245 = vmatpush1.msra.mxu0 0.0
    %246 = vmatprep.subr.mxu0 0.0
    %247 = vmatpush1.msra.mxu0 0.0
    %248 = vmatprep.subr.mxu0 0.0
    %249 = vmatpush1.msra.mxu0 0.0
    %250 = vmatprep.subr.mxu0 0.0
    %251 = vmatpush1.msra.mxu0 0.0
    %252 = vmatprep.subr.mxu0 0.0
    %253 = vmatpush1.msra.mxu0 0.0
    %254 = vmatprep.subr.mxu0 0.0
    %255 = vmatpush1.msra.mxu0 0.0
    %256 = vmatprep.subr.mxu0 0.0
    %257 = vmatpush1.msra.mxu0 0.0
    %258 = vmatprep.subr.mxu0 0.0
    %259 = vmatpush1.msra.mxu0 0.0
    %260 = vmatprep.subr.mxu0 0.0
    %261 = vmatpush1.msra.mxu0 0.0
    %262 = vmatprep.subr.mxu0 0.0
    %263 = vmatpush1.msra.mxu0 0.0
    %264 = vmatprep.subr.mxu0 0.0
    %265 = vmatpush1.msra.mxu0 0.0
    %266 = vmatprep.subr.mxu0 0.0
    %267 = vmatpush1.msra.mxu0 0.0
    %268 = vmatprep.subr.mxu0 0.0
    %269 = vmatpush1.msra.mxu0 0.0
    %270 = vmatprep.subr.mxu0 0.0
    %271 = vmatpush1.msra.mxu0 0.0
    %272 = vmatprep.mubr.f32.mxu0 0.0
    %273 = vmatmul.mubr.f32.gmra.mrb[0].mxu0 %v206
    %v274 = vpop.f32.mrb[0].mxu0
    %v275 = vadd.f32 %v203, %v274
    %v276 = vpop.f32.mrb[0].mxu0
    %277 = vdwg.mxu0
    %vm278 = vcmask 64512
    %v280 = vsel %vm278, %v101, 0
    %282 = vmatprep.subr.mxu0 0.0
    %283 = vmatpush1.msra.mxu0 %v192
    %284 = vmatprep.subr.mxu0 0.0
    %285 = vmatpush1.msra.mxu0 0.0
    %286 = vmatprep.subr.mxu0 0.0
    %287 = vmatpush1.msra.mxu0 0.0
    %288 = vmatprep.subr.mxu0 0.0
    %289 = vmatpush1.msra.mxu0 0.0
    %290 = vmatprep.subr.mxu0 0.0
    %291 = vmatpush1.msra.mxu0 0.0
    %292 = vmatprep.subr.mxu0 0.0
    %293 = vmatpush1.msra.mxu0 0.0
    %294 = vmatprep.subr.mxu0 0.0
    %295 = vmatpush1.msra.mxu0 0.0
    %296 = vmatprep.subr.mxu0 0.0
    %297 = vmatpush1.msra.mxu0 0.0
    %298 = vmatprep.subr.mxu0 0.0
    %299 = vmatpush1.msra.mxu0 0.0
    %300 = vmatprep.subr.mxu0 0.0
    %301 = vmatpush1.msra.mxu0 0.0
    %302 = vmatprep.subr.mxu0 0.0
    %303 = vmatpush1.msra.mxu0 0.0
    %304 = vmatprep.subr.mxu0 0.0
    %305 = vmatpush1.msra.mxu0 0.0
    %306 = vmatprep.subr.mxu0 0.0
    %307 = vmatpush1.msra.mxu0 0.0
    %308 = vmatprep.subr.mxu0 0.0
    %309 = vmatpush1.msra.mxu0 0.0
    %310 = vmatprep.subr.mxu0 0.0
    %311 = vmatpush1.msra.mxu0 0.0
    %312 = vmatprep.subr.mxu0 0.0
    %313 = vmatpush1.msra.mxu0 0.0
    %314 = vmatprep.subr.mxu0 0.0
    %315 = vmatpush1.msra.mxu0 0.0
    %316 = vmatprep.subr.mxu0 0.0
    %317 = vmatpush1.msra.mxu0 0.0
    %318 = vmatprep.subr.mxu0 0.0
    %319 = vmatpush1.msra.mxu0 0.0
    %320 = vmatprep.subr.mxu0 0.0
    %321 = vmatpush1.msra.mxu0 0.0
    %322 = vmatprep.subr.mxu0 0.0
    %323 = vmatpush1.msra.mxu0 0.0
    %324 = vmatprep.subr.mxu0 0.0
    %325 = vmatpush1.msra.mxu0 0.0
    %326 = vmatprep.subr.mxu0 0.0
    %327 = vmatpush1.msra.mxu0 0.0
    %328 = vmatprep.subr.mxu0 0.0
    %329 = vmatpush1.msra.mxu0 0.0
    %330 = vmatprep.subr.mxu0 0.0
    %331 = vmatpush1.msra.mxu0 0.0
    %332 = vmatprep.subr.mxu0 0.0
    %333 = vmatpush1.msra.mxu0 0.0
    %334 = vmatprep.subr.mxu0 0.0
    %335 = vmatpush1.msra.mxu0 0.0
    %336 = vmatprep.subr.mxu0 0.0
    %337 = vmatpush1.msra.mxu0 0.0
    %338 = vmatprep.subr.mxu0 0.0
    %339 = vmatpush1.msra.mxu0 0.0
    %340 = vmatprep.subr.mxu0 0.0
    %341 = vmatpush1.msra.mxu0 0.0
    %342 = vmatprep.subr.mxu0 0.0
    %343 = vmatpush1.msra.mxu0 0.0
    %344 = vmatprep.subr.mxu0 0.0
    %345 = vmatpush1.msra.mxu0 0.0
    %346 = vmatprep.mubr.f32.mxu0 0.0
    %347 = vmatmul.mubr.f32.gmra.mrb[0].mxu0 %v280
    %v348 = vpop.f32.mrb[0].mxu0
    %v349 = vadd.f32 %v275, %v348
    %v350 = vpop.f32.mrb[0].mxu0
    %351 = vdwg.mxu0
    %v352 = vmax.f32 %v349, 0.0
    %v353 = vpack.c.bf16 %v352, %v352
    %354 = vxpose.xlu0.c.b16.start [1/8] %v110, 128
    %355 = vxpose.xlu0.c.b16.cont [2/8] 0, 128
    %356 = vxpose.xlu0.c.b16.cont [3/8] 0, 128
    %357 = vxpose.xlu0.c.b16.cont [4/8] 0, 128
    %358 = vxpose.xlu0.c.b16.cont [5/8] 0, 128
    %359 = vxpose.xlu0.c.b16.cont [6/8] 0, 128
    %360 = vxpose.xlu0.c.b16.cont [7/8] 0, 128
    %361 = vxpose.xlu0.c.b16.end [8/8] 0, 128
    %v362 = vpop.trf.xlu0
    %v363 = vpop.trf.xlu0
    %v364 = vpop.trf.xlu0
    %v365 = vpop.trf.xlu0
    %v366 = vpop.trf.xlu0
    %v367 = vpop.trf.xlu0
    %v368 = vpop.trf.xlu0
    %v369 = vpop.trf.xlu0
    %v371 = vsel %vm278, %v362, 0
    %vm373 = vcmask 1043456
    %v375 = vsel %vm373, %v353, 0
    %377 = vmatprep.subr.bf16.mxu0 0
    %378 = vmatpush1.bf16.msra.mxu0 %v375
    %379 = vmatprep.subr.bf16.mxu0 0
    %380 = vmatpush1.bf16.msra.mxu0 0
    %381 = vmatprep.subr.bf16.mxu0 0
    %382 = vmatpush1.bf16.msra.mxu0 0
    %383 = vmatprep.subr.bf16.mxu0 0
    %384 = vmatpush1.bf16.msra.mxu0 0
    %385 = vmatprep.subr.bf16.mxu0 0
    %386 = vmatpush1.bf16.msra.mxu0 0
    %387 = vmatprep.subr.bf16.mxu0 0
    %388 = vmatpush1.bf16.msra.mxu0 0
    %389 = vmatprep.subr.bf16.mxu0 0
    %390 = vmatpush1.bf16.msra.mxu0 0
    %391 = vmatprep.subr.bf16.mxu0 0
    %392 = vmatpush1.bf16.msra.mxu0 0
    %393 = vmatprep.subr.bf16.mxu0 0
    %394 = vmatpush1.bf16.msra.mxu0 0
    %395 = vmatprep.subr.bf16.mxu0 0
    %396 = vmatpush1.bf16.msra.mxu0 0
    %397 = vmatprep.subr.bf16.mxu0 0
    %398 = vmatpush1.bf16.msra.mxu0 0
    %399 = vmatprep.subr.bf16.mxu0 0
    %400 = vmatpush1.bf16.msra.mxu0 0
    %401 = vmatprep.subr.bf16.mxu0 0
    %402 = vmatpush1.bf16.msra.mxu0 0
    %403 = vmatprep.subr.bf16.mxu0 0
    %404 = vmatpush1.bf16.msra.mxu0 0
    %405 = vmatprep.subr.bf16.mxu0 0
    %406 = vmatpush1.bf16.msra.mxu0 0
    %407 = vmatprep.subr.bf16.mxu0 0
    %408 = vmatpush1.bf16.msra.mxu0 0
    %409 = vmatprep.mubr.bf16.mxu0 0
    %410 = vmatmul.mubr.bf16.gmra.mrb[0].mxu0 %v371
    %v411 = vpop.f32.mrb[0].mxu0
    %v412 = vadd.f32 0.0, %v411
    %v413 = vpop.f32.mrb[0].mxu0
    %v414 = vpop.f32.mrb[0].mxu0
    %v415 = vpop.f32.mrb[0].mxu0
    %416 = vdwg.mxu0
    %v417 = vpack.c.bf16 %v412, %v412
    %v419 = vsel %vm278, %v102, 0
    %v422 = vsel %vm373, %v417, 0
    %424 = vmatprep.subr.bf16.mxu0 0
    %425 = vmatpush1.bf16.msra.mxu0 %v422
    %426 = vmatprep.subr.bf16.mxu0 0
    %427 = vmatpush1.bf16.msra.mxu0 0
    %428 = vmatprep.subr.bf16.mxu0 0
    %429 = vmatpush1.bf16.msra.mxu0 0
    %430 = vmatprep.subr.bf16.mxu0 0
    %431 = vmatpush1.bf16.msra.mxu0 0
    %432 = vmatprep.subr.bf16.mxu0 0
    %433 = vmatpush1.bf16.msra.mxu0 0
    %434 = vmatprep.subr.bf16.mxu0 0
    %435 = vmatpush1.bf16.msra.mxu0 0
    %436 = vmatprep.subr.bf16.mxu0 0
    %437 = vmatpush1.bf16.msra.mxu0 0
    %438 = vmatprep.subr.bf16.mxu0 0
    %439 = vmatpush1.bf16.msra.mxu0 0
    %440 = vmatprep.subr.bf16.mxu0 0
    %441 = vmatpush1.bf16.msra.mxu0 0
    %442 = vmatprep.subr.bf16.mxu0 0
    %443 = vmatpush1.bf16.msra.mxu0 0
    %444 = vmatprep.subr.bf16.mxu0 0
    %445 = vmatpush1.bf16.msra.mxu0 0
    %446 = vmatprep.subr.bf16.mxu0 0
    %447 = vmatpush1.bf16.msra.mxu0 0
    %448 = vmatprep.subr.bf16.mxu0 0
    %449 = vmatpush1.bf16.msra.mxu0 0
    %450 = vmatprep.subr.bf16.mxu0 0
    %451 = vmatpush1.bf16.msra.mxu0 0
    %452 = vmatprep.subr.bf16.mxu0 0
    %453 = vmatpush1.bf16.msra.mxu0 0
    %454 = vmatprep.subr.bf16.mxu0 0
    %455 = vmatpush1.bf16.msra.mxu0 0
    %456 = vmatprep.mubr.bf16.mxu0 0
    %457 = vmatmul.mubr.bf16.gmra.mrb[0].mxu0 %v419
    %v458 = vpop.f32.mrb[0].mxu0
    %v459 = vadd.f32 0.0, %v458
    %v460 = vpop.f32.mrb[0].mxu0
    %v461 = vpop.f32.mrb[0].mxu0
    %v462 = vpop.f32.mrb[0].mxu0
    %463 = vdwg.mxu0
    %464 = vst [vmem:[#allocation2] sm:$0xff] %v352
    %s465 = sld [smem:[#allocation10]]
    %s466 = scalar_lea.vmem [#allocation2], %s465
    %v467 = vld [vmem:[%s466] sm:$0x1]
    %468 = vst [vmem:[#allocation3] sm:$0x1] %v467
    %s469 = sld [smem:[#allocation10 + $0x1]]
    %s470 = scalar_lea.vmem [#allocation2], %s469
    %v471 = vld [vmem:[%s470] sm:$0x1]
    %472 = vst [vmem:[#allocation3 + $0x1] sm:$0x1] %v471
    %s473 = sld [smem:[#allocation10 + $0x2]]
    %s474 = scalar_lea.vmem [#allocation2], %s473
    %v475 = vld [vmem:[%s474] sm:$0x1]
    %476 = vst [vmem:[#allocation3 + $0x2] sm:$0x1] %v475
    %s477 = sld [smem:[#allocation10 + $0x3]]
    %s478 = scalar_lea.vmem [#allocation2], %s477
    %v479 = vld [vmem:[%s478] sm:$0x1]
    %480 = vst [vmem:[#allocation3 + $0x3] sm:$0x1] %v479
    %s481 = sld [smem:[#allocation10 + $0x4]]
    %s482 = scalar_lea.vmem [#allocation2], %s481
    %v483 = vld [vmem:[%s482] sm:$0x1]
    %484 = vst [vmem:[#allocation3 + $0x4] sm:$0x1] %v483
    %s485 = sld [smem:[#allocation10 + $0x5]]
    %s486 = scalar_lea.vmem [#allocation2], %s485
    %v487 = vld [vmem:[%s486] sm:$0x1]
    %488 = vst [vmem:[#allocation3 + $0x5] sm:$0x1] %v487
    %s489 = sld [smem:[#allocation10 + $0x6]]
    %s490 = scalar_lea.vmem [#allocation2], %s489
    %v491 = vld [vmem:[%s490] sm:$0x1]
    %492 = vst [vmem:[#allocation3 + $0x6] sm:$0x1] %v491
    %s493 = sld [smem:[#allocation10 + $0x7]]
    %s494 = scalar_lea.vmem [#allocation2], %s493
    %v495 = vld [vmem:[%s494] sm:$0x1]
    %496 = vst [vmem:[#allocation3 + $0x7] sm:$0x1] %v495
    %v497 = vld [vmem:[#allocation3] sm:$0xff]
    %v498 = vsub.f32 %v459, %v497
    %v499 = vpack.c.bf16 %v498, %v498
    %v500 = vld [vmem:[#allocation11] sm:$0xff]
    %v501 = vld [vmem:[#allocation11 + $0x8] sm:$0xff]
    %v502 = vld [vmem:[#allocation11 + $0x10] sm:$0xff]
    %v503 = vld [vmem:[#allocation11 + $0x18] sm:$0xff]
    %v504 = vld [vmem:[#allocation11 + $0x20] sm:$0xff]
    %v505 = vld [vmem:[#allocation11 + $0x28] sm:$0xff]
    %v506 = vld [vmem:[#allocation11 + $0x30] sm:$0xff]
    %v507 = vld [vmem:[#allocation11 + $0x38] sm:$0xff]
    %v508 = vld [vmem:[#allocation11 + $0x40] sm:$0xff]
    %v509 = vld [vmem:[#allocation11 + $0x48] sm:$0xff]
    %v510 = vld [vmem:[#allocation11 + $0x50] sm:$0xff]
    %v511 = vld [vmem:[#allocation11 + $0x58] sm:$0xff]
    %v512 = vld [vmem:[#allocation11 + $0x60] sm:$0xff]
    %v513 = vld [vmem:[#allocation11 + $0x68] sm:$0xff]
    %v514 = vld [vmem:[#allocation11 + $0x70] sm:$0xff]
    %v515 = vld [vmem:[#allocation11 + $0x78] sm:$0xff]
    %v516 = vpack.c.bf16 %v501, %v500
    %v517 = vpack.c.bf16 %v503, %v502
    %v518 = vpack.c.bf16 %v505, %v504
    %v519 = vpack.c.bf16 %v507, %v506
    %v520 = vpack.c.bf16 %v509, %v508
    %v521 = vpack.c.bf16 %v511, %v510
    %v522 = vpack.c.bf16 %v513, %v512
    %v523 = vpack.c.bf16 %v515, %v514
    %v524 = vld [vmem:[%s10] sm:$0x1]
    %v526 = vlaneseq
    %v527 = vshrl.u32 %v526, 7
    %v528 = vsub.s32 0, %v527
    %v529 = vrot.slane %v524, %v528
    %531 = vmatprep.subr.bf16.mxu0 0
    %532 = vmatpush1.bf16.msra.mxu0 %v516
    %533 = vmatprep.subr.bf16.mxu0 0
    %534 = vmatpush1.bf16.msra.mxu0 %v517
    %535 = vmatprep.subr.bf16.mxu0 0
    %536 = vmatpush1.bf16.msra.mxu0 %v518
    %537 = vmatprep.subr.bf16.mxu0 0
    %538 = vmatpush1.bf16.msra.mxu0 %v519
    %539 = vmatprep.subr.bf16.mxu0 0
    %540 = vmatpush1.bf16.msra.mxu0 %v520
    %541 = vmatprep.subr.bf16.mxu0 0
    %542 = vmatpush1.bf16.msra.mxu0 %v521
    %543 = vmatprep.subr.bf16.mxu0 0
    %544 = vmatpush1.bf16.msra.mxu0 %v522
    %545 = vmatprep.subr.bf16.mxu0 0
    %546 = vmatpush1.bf16.msra.mxu0 %v523
    %547 = vmatprep.subr.bf16.mxu0 0
    %548 = vmatpush1.bf16.msra.mxu0 0
    %549 = vmatprep.subr.bf16.mxu0 0
    %550 = vmatpush1.bf16.msra.mxu0 0
    %551 = vmatprep.subr.bf16.mxu0 0
    %552 = vmatpush1.bf16.msra.mxu0 0
    %553 = vmatprep.subr.bf16.mxu0 0
    %554 = vmatpush1.bf16.msra.mxu0 0
    %555 = vmatprep.subr.bf16.mxu0 0
    %556 = vmatpush1.bf16.msra.mxu0 0
    %557 = vmatprep.subr.bf16.mxu0 0
    %558 = vmatpush1.bf16.msra.mxu0 0
    %559 = vmatprep.subr.bf16.mxu0 0
    %560 = vmatpush1.bf16.msra.mxu0 0
    %561 = vmatprep.subr.bf16.mxu0 0
    %562 = vmatpush1.bf16.msra.mxu0 0
    %563 = vmatprep.mubr.bf16.mxu0 0
    %564 = vmatmul.mubr.bf16.gmra.mrb[0].mxu0 %v499
    %v565 = vpop.f32.mrb[0].mxu0
    %v566 = vadd.f32 %v529, %v565
    %v567 = vpop.f32.mrb[0].mxu0
    %v568 = vpop.f32.mrb[0].mxu0
    %v569 = vpop.f32.mrb[0].mxu0
    %570 = vdwg.mxu0
    %v571 = vadd.f32 %v566, %v349
    %v572 = vmax.f32 %v571, 0.0
    %v573 = vpack.c.bf16 %v572, %v572
    %v575 = vsel %vm373, %v573, 0
    %577 = vmatprep.subr.bf16.mxu0 0
    %578 = vmatpush1.bf16.msra.mxu0 %v575
    %579 = vmatprep.subr.bf16.mxu0 0
    %580 = vmatpush1.bf16.msra.mxu0 0
    %581 = vmatprep.subr.bf16.mxu0 0
    %582 = vmatpush1.bf16.msra.mxu0 0
    %583 = vmatprep.subr.bf16.mxu0 0
    %584 = vmatpush1.bf16.msra.mxu0 0
    %585 = vmatprep.subr.bf16.mxu0 0
    %586 = vmatpush1.bf16.msra.mxu0 0
    %587 = vmatprep.subr.bf16.mxu0 0
    %588 = vmatpush1.bf16.msra.mxu0 0
    %589 = vmatprep.subr.bf16.mxu0 0
    %590 = vmatpush1.bf16.msra.mxu0 0
    %591 = vmatprep.subr.bf16.mxu0 0
    %592 = vmatpush1.bf16.msra.mxu0 0
    %593 = vmatprep.subr.bf16.mxu0 0
    %594 = vmatpush1.bf16.msra.mxu0 0
    %595 = vmatprep.subr.bf16.mxu0 0
    %596 = vmatpush1.bf16.msra.mxu0 0
    %597 = vmatprep.subr.bf16.mxu0 0
    %598 = vmatpush1.bf16.msra.mxu0 0
    %599 = vmatprep.subr.bf16.mxu0 0
    %600 = vmatpush1.bf16.msra.mxu0 0
    %601 = vmatprep.subr.bf16.mxu0 0
    %602 = vmatpush1.bf16.msra.mxu0 0
    %603 = vmatprep.subr.bf16.mxu0 0
    %604 = vmatpush1.bf16.msra.mxu0 0
    %605 = vmatprep.subr.bf16.mxu0 0
    %606 = vmatpush1.bf16.msra.mxu0 0
    %607 = vmatprep.subr.bf16.mxu0 0
    %608 = vmatpush1.bf16.msra.mxu0 0
    %609 = vmatprep.mubr.bf16.mxu0 0
    %610 = vmatmul.mubr.bf16.gmra.mrb[0].mxu0 %v371
    %v611 = vpop.f32.mrb[0].mxu0
    %v612 = vadd.f32 0.0, %v611
    %v613 = vpop.f32.mrb[0].mxu0
    %v614 = vpop.f32.mrb[0].mxu0
    %v615 = vpop.f32.mrb[0].mxu0
    %616 = vdwg.mxu0
    %v617 = vpack.c.bf16 %v612, %v612
    %v619 = vsel %vm373, %v617, 0
    %621 = vmatprep.subr.bf16.mxu0 0
    %622 = vmatpush1.bf16.msra.mxu0 %v619
    %623 = vmatprep.subr.bf16.mxu0 0
    %624 = vmatpush1.bf16.msra.mxu0 0
    %625 = vmatprep.subr.bf16.mxu0 0
    %626 = vmatpush1.bf16.msra.mxu0 0
    %627 = vmatprep.subr.bf16.mxu0 0
    %628 = vmatpush1.bf16.msra.mxu0 0
    %629 = vmatprep.subr.bf16.mxu0 0
    %630 = vmatpush1.bf16.msra.mxu0 0
    %631 = vmatprep.subr.bf16.mxu0 0
    %632 = vmatpush1.bf16.msra.mxu0 0
    %633 = vmatprep.subr.bf16.mxu0 0
    %634 = vmatpush1.bf16.msra.mxu0 0
    %635 = vmatprep.subr.bf16.mxu0 0
    %636 = vmatpush1.bf16.msra.mxu0 0
    %637 = vmatprep.subr.bf16.mxu0 0
    %638 = vmatpush1.bf16.msra.mxu0 0
    %639 = vmatprep.subr.bf16.mxu0 0
    %640 = vmatpush1.bf16.msra.mxu0 0
    %641 = vmatprep.subr.bf16.mxu0 0
    %642 = vmatpush1.bf16.msra.mxu0 0
    %643 = vmatprep.subr.bf16.mxu0 0
    %644 = vmatpush1.bf16.msra.mxu0 0
    %645 = vmatprep.subr.bf16.mxu0 0
    %646 = vmatpush1.bf16.msra.mxu0 0
    %647 = vmatprep.subr.bf16.mxu0 0
    %648 = vmatpush1.bf16.msra.mxu0 0
    %649 = vmatprep.subr.bf16.mxu0 0
    %650 = vmatpush1.bf16.msra.mxu0 0
    %651 = vmatprep.subr.bf16.mxu0 0
    %652 = vmatpush1.bf16.msra.mxu0 0
    %653 = vmatprep.mubr.bf16.mxu0 0
    %654 = vmatmul.mubr.bf16.gmra.mrb[0].mxu0 %v419
    %v655 = vpop.f32.mrb[0].mxu0
    %v656 = vadd.f32 0.0, %v655
    %v657 = vpop.f32.mrb[0].mxu0
    %v658 = vpop.f32.mrb[0].mxu0
    %v659 = vpop.f32.mrb[0].mxu0
    %660 = vdwg.mxu0
    %661 = vst [vmem:[#allocation2] sm:$0xff] %v572
    %s662 = sld [smem:[#allocation10]]
    %s663 = scalar_lea.vmem [#allocation2], %s662
    %v664 = vld [vmem:[%s663] sm:$0x1]
    %665 = vst [vmem:[#allocation3] sm:$0x1] %v664
    %s666 = sld [smem:[#allocation10 + $0x1]]
    %s667 = scalar_lea.vmem [#allocation2], %s666
    %v668 = vld [vmem:[%s667] sm:$0x1]
    %669 = vst [vmem:[#allocation3 + $0x1] sm:$0x1] %v668
    %s670 = sld [smem:[#allocation10 + $0x2]]
    %s671 = scalar_lea.vmem [#allocation2], %s670
    %v672 = vld [vmem:[%s671] sm:$0x1]
    %673 = vst [vmem:[#allocation3 + $0x2] sm:$0x1] %v672
    %s674 = sld [smem:[#allocation10 + $0x3]]
    %s675 = scalar_lea.vmem [#allocation2], %s674
    %v676 = vld [vmem:[%s675] sm:$0x1]
    %677 = vst [vmem:[#allocation3 + $0x3] sm:$0x1] %v676
    %s678 = sld [smem:[#allocation10 + $0x4]]
    %s679 = scalar_lea.vmem [#allocation2], %s678
    %v680 = vld [vmem:[%s679] sm:$0x1]
    %681 = vst [vmem:[#allocation3 + $0x4] sm:$0x1] %v680
    %s682 = sld [smem:[#allocation10 + $0x5]]
    %s683 = scalar_lea.vmem [#allocation2], %s682
    %v684 = vld [vmem:[%s683] sm:$0x1]
    %685 = vst [vmem:[#allocation3 + $0x5] sm:$0x1] %v684
    %s686 = sld [smem:[#allocation10 + $0x6]]
    %s687 = scalar_lea.vmem [#allocation2], %s686
    %v688 = vld [vmem:[%s687] sm:$0x1]
    %689 = vst [vmem:[#allocation3 + $0x6] sm:$0x1] %v688
    %s690 = sld [smem:[#allocation10 + $0x7]]
    %s691 = scalar_lea.vmem [#allocation2], %s690
    %v692 = vld [vmem:[%s691] sm:$0x1]
    %693 = vst [vmem:[#allocation3 + $0x7] sm:$0x1] %v692
    %v694 = vld [vmem:[#allocation3] sm:$0xff]
    %v695 = vsub.f32 %v656, %v694
    %v696 = vpack.c.bf16 %v695, %v695
    %s697 = scalar_lea.vmem [#allocation11], 128
    %v698 = vld [vmem:[%s697] sm:$0xff]
    %v699 = vld [vmem:[%s697 + $0x8] sm:$0xff]
    %v700 = vld [vmem:[%s697 + $0x10] sm:$0xff]
    %v701 = vld [vmem:[%s697 + $0x18] sm:$0xff]
    %v702 = vld [vmem:[%s697 + $0x20] sm:$0xff]
    %v703 = vld [vmem:[%s697 + $0x28] sm:$0xff]
    %v704 = vld [vmem:[%s697 + $0x30] sm:$0xff]
    %v705 = vld [vmem:[%s697 + $0x38] sm:$0xff]
    %v706 = vld [vmem:[%s697 + $0x40] sm:$0xff]
    %v707 = vld [vmem:[%s697 + $0x48] sm:$0xff]
    %v708 = vld [vmem:[%s697 + $0x50] sm:$0xff]
    %v709 = vld [vmem:[%s697 + $0x58] sm:$0xff]
    %v710 = vld [vmem:[%s697 + $0x60] sm:$0xff]
    %v711 = vld [vmem:[%s697 + $0x68] sm:$0xff]
    %v712 = vld [vmem:[%s697 + $0x70] sm:$0xff]
    %v713 = vld [vmem:[%s697 + $0x78] sm:$0xff]
    %v714 = vpack.c.bf16 %v699, %v698
    %v715 = vpack.c.bf16 %v701, %v700
    %v716 = vpack.c.bf16 %v703, %v702
    %v717 = vpack.c.bf16 %v705, %v704
    %v718 = vpack.c.bf16 %v707, %v706
    %v719 = vpack.c.bf16 %v709, %v708
    %v720 = vpack.c.bf16 %v711, %v710
    %v721 = vpack.c.bf16 %v713, %v712
    %s722 = scalar_lea.vmem %s10, 1
    %v723 = vld [vmem:[%s722] sm:$0x1]
    %v725 = vlaneseq
    %v726 = vshrl.u32 %v725, 7
    %v727 = vsub.s32 0, %v726
    %v728 = vrot.slane %v723, %v727
    %730 = vmatprep.subr.bf16.mxu0 0
    %731 = vmatpush1.bf16.msra.mxu0 %v714
    %732 = vmatprep.subr.bf16.mxu0 0
    %733 = vmatpush1.bf16.msra.mxu0 %v715
    %734 = vmatprep.subr.bf16.mxu0 0
    %735 = vmatpush1.bf16.msra.mxu0 %v716
    %736 = vmatprep.subr.bf16.mxu0 0
    %737 = vmatpush1.bf16.msra.mxu0 %v717
    %738 = vmatprep.subr.bf16.mxu0 0
    %739 = vmatpush1.bf16.msra.mxu0 %v718
    %740 = vmatprep.subr.bf16.mxu0 0
    %741 = vmatpush1.bf16.msra.mxu0 %v719
    %742 = vmatprep.subr.bf16.mxu0 0
    %743 = vmatpush1.bf16.msra.mxu0 %v720
    %744 = vmatprep.subr.bf16.mxu0 0
    %745 = vmatpush1.bf16.msra.mxu0 %v721
    %746 = vmatprep.subr.bf16.mxu0 0
    %747 = vmatpush1.bf16.msra.mxu0 0
    %748 = vmatprep.subr.bf16.mxu0 0
    %749 = vmatpush1.bf16.msra.mxu0 0
    %750 = vmatprep.subr.bf16.mxu0 0
    %751 = vmatpush1.bf16.msra.mxu0 0
    %752 = vmatprep.subr.bf16.mxu0 0
    %753 = vmatpush1.bf16.msra.mxu0 0
    %754 = vmatprep.subr.bf16.mxu0 0
    %755 = vmatpush1.bf16.msra.mxu0 0
    %756 = vmatprep.subr.bf16.mxu0 0
    %757 = vmatpush1.bf16.msra.mxu0 0
    %758 = vmatprep.subr.bf16.mxu0 0
    %759 = vmatpush1.bf16.msra.mxu0 0
    %760 = vmatprep.subr.bf16.mxu0 0
    %761 = vmatpush1.bf16.msra.mxu0 0
    %762 = vmatprep.mubr.bf16.mxu0 0
    %763 = vmatmul.mubr.bf16.gmra.mrb[0].mxu0 %v696
    %v764 = vpop.f32.mrb[0].mxu0
    %v765 = vadd.f32 %v728, %v764
    %v766 = vpop.f32.mrb[0].mxu0
    %v767 = vpop.f32.mrb[0].mxu0
    %v768 = vpop.f32.mrb[0].mxu0
    %769 = vdwg.mxu0
    %v770 = vadd.f32 %v765, %v571
    %v771 = vmax.f32 %v770, 0.0
    %v772 = vpack.c.bf16 %v771, %v771
    %v774 = vsel %vm373, %v772, 0
    %776 = vmatprep.subr.bf16.mxu0 0
    %777 = vmatpush1.bf16.msra.mxu0 %v774
    %778 = vmatprep.subr.bf16.mxu0 0
    %779 = vmatpush1.bf16.msra.mxu0 0
    %780 = vmatprep.subr.bf16.mxu0 0
    %781 = vmatpush1.bf16.msra.mxu0 0
    %782 = vmatprep.subr.bf16.mxu0 0
    %783 = vmatpush1.bf16.msra.mxu0 0
    %784 = vmatprep.subr.bf16.mxu0 0
    %785 = vmatpush1.bf16.msra.mxu0 0
    %786 = vmatprep.subr.bf16.mxu0 0
    %787 = vmatpush1.bf16.msra.mxu0 0
    %788 = vmatprep.subr.bf16.mxu0 0
    %789 = vmatpush1.bf16.msra.mxu0 0
    %790 = vmatprep.subr.bf16.mxu0 0
    %791 = vmatpush1.bf16.msra.mxu0 0
    %792 = vmatprep.subr.bf16.mxu0 0
    %793 = vmatpush1.bf16.msra.mxu0 0
    %794 = vmatprep.subr.bf16.mxu0 0
    %795 = vmatpush1.bf16.msra.mxu0 0
    %796 = vmatprep.subr.bf16.mxu0 0
    %797 = vmatpush1.bf16.msra.mxu0 0
    %798 = vmatprep.subr.bf16.mxu0 0
    %799 = vmatpush1.bf16.msra.mxu0 0
    %800 = vmatprep.subr.bf16.mxu0 0
    %801 = vmatpush1.bf16.msra.mxu0 0
    %802 = vmatprep.subr.bf16.mxu0 0
    %803 = vmatpush1.bf16.msra.mxu0 0
    %804 = vmatprep.subr.bf16.mxu0 0
    %805 = vmatpush1.bf16.msra.mxu0 0
    %806 = vmatprep.subr.bf16.mxu0 0
    %807 = vmatpush1.bf16.msra.mxu0 0
    %808 = vmatprep.mubr.bf16.mxu0 0
    %809 = vmatmul.mubr.bf16.gmra.mrb[0].mxu0 %v371
    %v810 = vpop.f32.mrb[0].mxu0
    %v811 = vadd.f32 0.0, %v810
    %v812 = vpop.f32.mrb[0].mxu0
    %v813 = vpop.f32.mrb[0].mxu0
    %v814 = vpop.f32.mrb[0].mxu0
    %815 = vdwg.mxu0
    %v816 = vpack.c.bf16 %v811, %v811
    %v818 = vsel %vm373, %v816, 0
    %820 = vmatprep.subr.bf16.mxu0 0
    %821 = vmatpush1.bf16.msra.mxu0 %v818
    %822 = vmatprep.subr.bf16.mxu0 0
    %823 = vmatpush1.bf16.msra.mxu0 0
    %824 = vmatprep.subr.bf16.mxu0 0
    %825 = vmatpush1.bf16.msra.mxu0 0
    %826 = vmatprep.subr.bf16.mxu0 0
    %827 = vmatpush1.bf16.msra.mxu0 0
    %828 = vmatprep.subr.bf16.mxu0 0
    %829 = vmatpush1.bf16.msra.mxu0 0
    %830 = vmatprep.subr.bf16.mxu0 0
    %831 = vmatpush1.bf16.msra.mxu0 0
    %832 = vmatprep.subr.bf16.mxu0 0
    %833 = vmatpush1.bf16.msra.mxu0 0
    %834 = vmatprep.subr.bf16.mxu0 0
    %835 = vmatpush1.bf16.msra.mxu0 0
    %836 = vmatprep.subr.bf16.mxu0 0
    %837 = vmatpush1.bf16.msra.mxu0 0
    %838 = vmatprep.subr.bf16.mxu0 0
    %839 = vmatpush1.bf16.msra.mxu0 0
    %840 = vmatprep.subr.bf16.mxu0 0
    %841 = vmatpush1.bf16.msra.mxu0 0
    %842 = vmatprep.subr.bf16.mxu0 0
    %843 = vmatpush1.bf16.msra.mxu0 0
    %844 = vmatprep.subr.bf16.mxu0 0
    %845 = vmatpush1.bf16.msra.mxu0 0
    %846 = vmatprep.subr.bf16.mxu0 0
    %847 = vmatpush1.bf16.msra.mxu0 0
    %848 = vmatprep.subr.bf16.mxu0 0
    %849 = vmatpush1.bf16.msra.mxu0 0
    %850 = vmatprep.subr.bf16.mxu0 0
    %851 = vmatpush1.bf16.msra.mxu0 0
    %852 = vmatprep.mubr.bf16.mxu0 0
    %853 = vmatmul.mubr.bf16.gmra.mrb[0].mxu0 %v419
    %v854 = vpop.f32.mrb[0].mxu0
    %v855 = vadd.f32 0.0, %v854
    %v856 = vpop.f32.mrb[0].mxu0
    %v857 = vpop.f32.mrb[0].mxu0
    %v858 = vpop.f32.mrb[0].mxu0
    %859 = vdwg.mxu0
    %860 = vst [vmem:[#allocation2] sm:$0xff] %v771
    %s861 = sld [smem:[#allocation10]]
    %s862 = scalar_lea.vmem [#allocation2], %s861
    %v863 = vld [vmem:[%s862] sm:$0x1]
    %864 = vst [vmem:[#allocation3] sm:$0x1] %v863
    %s865 = sld [smem:[#allocation10 + $0x1]]
    %s866 = scalar_lea.vmem [#allocation2], %s865
    %v867 = vld [vmem:[%s866] sm:$0x1]
    %868 = vst [vmem:[#allocation3 + $0x1] sm:$0x1] %v867
    %s869 = sld [smem:[#allocation10 + $0x2]]
    %s870 = scalar_lea.vmem [#allocation2], %s869
    %v871 = vld [vmem:[%s870] sm:$0x1]
    %872 = vst [vmem:[#allocation3 + $0x2] sm:$0x1] %v871
    %s873 = sld [smem:[#allocation10 + $0x3]]
    %s874 = scalar_lea.vmem [#allocation2], %s873
    %v875 = vld [vmem:[%s874] sm:$0x1]
    %876 = vst [vmem:[#allocation3 + $0x3] sm:$0x1] %v875
    %s877 = sld [smem:[#allocation10 + $0x4]]
    %s878 = scalar_lea.vmem [#allocation2], %s877
    %v879 = vld [vmem:[%s878] sm:$0x1]
    %880 = vst [vmem:[#allocation3 + $0x4] sm:$0x1] %v879
    %s881 = sld [smem:[#allocation10 + $0x5]]
    %s882 = scalar_lea.vmem [#allocation2], %s881
    %v883 = vld [vmem:[%s882] sm:$0x1]
    %884 = vst [vmem:[#allocation3 + $0x5] sm:$0x1] %v883
    %s885 = sld [smem:[#allocation10 + $0x6]]
    %s886 = scalar_lea.vmem [#allocation2], %s885
    %v887 = vld [vmem:[%s886] sm:$0x1]
    %888 = vst [vmem:[#allocation3 + $0x6] sm:$0x1] %v887
    %s889 = sld [smem:[#allocation10 + $0x7]]
    %s890 = scalar_lea.vmem [#allocation2], %s889
    %v891 = vld [vmem:[%s890] sm:$0x1]
    %892 = vst [vmem:[#allocation3 + $0x7] sm:$0x1] %v891
    %v893 = vld [vmem:[#allocation3] sm:$0xff]
    %v894 = vsub.f32 %v855, %v893
    %v895 = vpack.c.bf16 %v894, %v894
    %s896 = scalar_lea.vmem [#allocation11], 256
    %v897 = vld [vmem:[%s896] sm:$0xff]
    %v898 = vld [vmem:[%s896 + $0x8] sm:$0xff]
    %v899 = vld [vmem:[%s896 + $0x10] sm:$0xff]
    %v900 = vld [vmem:[%s896 + $0x18] sm:$0xff]
    %v901 = vld [vmem:[%s896 + $0x20] sm:$0xff]
    %v902 = vld [vmem:[%s896 + $0x28] sm:$0xff]
    %v903 = vld [vmem:[%s896 + $0x30] sm:$0xff]
    %v904 = vld [vmem:[%s896 + $0x38] sm:$0xff]
    %v905 = vld [vmem:[%s896 + $0x40] sm:$0xff]
    %v906 = vld [vmem:[%s896 + $0x48] sm:$0xff]
    %v907 = vld [vmem:[%s896 + $0x50] sm:$0xff]
    %v908 = vld [vmem:[%s896 + $0x58] sm:$0xff]
    %v909 = vld [vmem:[%s896 + $0x60] sm:$0xff]
    %v910 = vld [vmem:[%s896 + $0x68] sm:$0xff]
    %v911 = vld [vmem:[%s896 + $0x70] sm:$0xff]
    %v912 = vld [vmem:[%s896 + $0x78] sm:$0xff]
    %v913 = vpack.c.bf16 %v898, %v897
    %v914 = vpack.c.bf16 %v900, %v899
    %v915 = vpack.c.bf16 %v902, %v901
    %v916 = vpack.c.bf16 %v904, %v903
    %v917 = vpack.c.bf16 %v906, %v905
    %v918 = vpack.c.bf16 %v908, %v907
    %v919 = vpack.c.bf16 %v910, %v909
    %v920 = vpack.c.bf16 %v912, %v911
    %s921 = scalar_lea.vmem %s10, 2
    %v922 = vld [vmem:[%s921] sm:$0x1]
    %v924 = vlaneseq
    %v925 = vshrl.u32 %v924, 7
    %v926 = vsub.s32 0, %v925
    %v927 = vrot.slane %v922, %v926
    %929 = vmatprep.subr.bf16.mxu0 0
    %930 = vmatpush1.bf16.msra.mxu0 %v913
    %931 = vmatprep.subr.bf16.mxu0 0
    %932 = vmatpush1.bf16.msra.mxu0 %v914
    %933 = vmatprep.subr.bf16.mxu0 0
    %934 = vmatpush1.bf16.msra.mxu0 %v915
    %935 = vmatprep.subr.bf16.mxu0 0
    %936 = vmatpush1.bf16.msra.mxu0 %v916
    %937 = vmatprep.subr.bf16.mxu0 0
    %938 = vmatpush1.bf16.msra.mxu0 %v917
    %939 = vmatprep.subr.bf16.mxu0 0
    %940 = vmatpush1.bf16.msra.mxu0 %v918
    %941 = vmatprep.subr.bf16.mxu0 0
    %942 = vmatpush1.bf16.msra.mxu0 %v919
    %943 = vmatprep.subr.bf16.mxu0 0
    %944 = vmatpush1.bf16.msra.mxu0 %v920
    %945 = vmatprep.subr.bf16.mxu0 0
    %946 = vmatpush1.bf16.msra.mxu0 0
    %947 = vmatprep.subr.bf16.mxu0 0
    %948 = vmatpush1.bf16.msra.mxu0 0
    %949 = vmatprep.subr.bf16.mxu0 0
    %950 = vmatpush1.bf16.msra.mxu0 0
    %951 = vmatprep.subr.bf16.mxu0 0
    %952 = vmatpush1.bf16.msra.mxu0 0
    %953 = vmatprep.subr.bf16.mxu0 0
    %954 = vmatpush1.bf16.msra.mxu0 0
    %955 = vmatprep.subr.bf16.mxu0 0
    %956 = vmatpush1.bf16.msra.mxu0 0
    %957 = vmatprep.subr.bf16.mxu0 0
    %958 = vmatpush1.bf16.msra.mxu0 0
    %959 = vmatprep.subr.bf16.mxu0 0
    %960 = vmatpush1.bf16.msra.mxu0 0
    %961 = vmatprep.mubr.bf16.mxu0 0
    %962 = vmatmul.mubr.bf16.gmra.mrb[0].mxu0 %v895
    %v963 = vpop.f32.mrb[0].mxu0
    %v964 = vadd.f32 %v927, %v963
    %v965 = vpop.f32.mrb[0].mxu0
    %v966 = vpop.f32.mrb[0].mxu0
    %v967 = vpop.f32.mrb[0].mxu0
    %968 = vdwg.mxu0
    %v969 = vadd.f32 %v964, %v770
    %970 = vst [vmem:[#allocation12] sm:$0xff] %v969
    %971 = vxpose.xlu0.b32.start [1/16] %v101, 128
    %972 = vxpose.xlu0.b32.cont [2/16] 0.0, 128
    %973 = vxpose.xlu0.b32.cont [3/16] 0.0, 128
    %974 = vxpose.xlu0.b32.cont [4/16] 0.0, 128
    %975 = vxpose.xlu0.b32.cont [5/16] 0.0, 128
    %976 = vxpose.xlu0.b32.cont [6/16] 0.0, 128
    %977 = vxpose.xlu0.b32.cont [7/16] 0.0, 128
    %978 = vxpose.xlu0.b32.cont [8/16] 0.0, 128
    %979 = vxpose.xlu0.b32.cont [9/16] 0.0, 128
    %980 = vxpose.xlu0.b32.cont [10/16] 0.0, 128
    %981 = vxpose.xlu0.b32.cont [11/16] 0.0, 128
    %982 = vxpose.xlu0.b32.cont [12/16] 0.0, 128
    %983 = vxpose.xlu0.b32.cont [13/16] 0.0, 128
    %984 = vxpose.xlu0.b32.cont [14/16] 0.0, 128
    %985 = vxpose.xlu0.b32.cont [15/16] 0.0, 128
    %986 = vxpose.xlu0.b32.end [16/16] 0.0, 128
    %v987 = vpop.trf.xlu0
    %v988 = vpop.trf.xlu0
    %v989 = vpop.trf.xlu0
    %v990 = vpop.trf.xlu0
    %v991 = vpop.trf.xlu0
    %v992 = vpop.trf.xlu0
    %v993 = vpop.trf.xlu0
    %v994 = vpop.trf.xlu0
    %v995 = vpop.trf.xlu0
    %v996 = vpop.trf.xlu0
    %v997 = vpop.trf.xlu0
    %v998 = vpop.trf.xlu0
    %v999 = vpop.trf.xlu0
    %v1000 = vpop.trf.xlu0
    %v1001 = vpop.trf.xlu0
    %v1002 = vpop.trf.xlu0
    %v1004 = vsel %vm278, %v987, 0
    %1006 = vmatprep.subr.mxu0 0.0
    %1007 = vmatpush1.msra.mxu0 %v969
    %1008 = vmatprep.subr.mxu0 0.0
    %1009 = vmatpush1.msra.mxu0 0.0
    %1010 = vmatprep.subr.mxu0 0.0
    %1011 = vmatpush1.msra.mxu0 0.0
    %1012 = vmatprep.subr.mxu0 0.0
    %1013 = vmatpush1.msra.mxu0 0.0
    %1014 = vmatprep.subr.mxu0 0.0
    %1015 = vmatpush1.msra.mxu0 0.0
    %1016 = vmatprep.subr.mxu0 0.0
    %1017 = vmatpush1.msra.mxu0 0.0
    %1018 = vmatprep.subr.mxu0 0.0
    %1019 = vmatpush1.msra.mxu0 0.0
    %1020 = vmatprep.subr.mxu0 0.0
    %1021 = vmatpush1.msra.mxu0 0.0
    %1022 = vmatprep.subr.mxu0 0.0
    %1023 = vmatpush1.msra.mxu0 0.0
    %1024 = vmatprep.subr.mxu0 0.0
    %1025 = vmatpush1.msra.mxu0 0.0
    %1026 = vmatprep.subr.mxu0 0.0
    %1027 = vmatpush1.msra.mxu0 0.0
    %1028 = vmatprep.subr.mxu0 0.0
    %1029 = vmatpush1.msra.mxu0 0.0
    %1030 = vmatprep.subr.mxu0 0.0
    %1031 = vmatpush1.msra.mxu0 0.0
    %1032 = vmatprep.subr.mxu0 0.0
    %1033 = vmatpush1.msra.mxu0 0.0
    %1034 = vmatprep.subr.mxu0 0.0
    %1035 = vmatpush1.msra.mxu0 0.0
    %1036 = vmatprep.subr.mxu0 0.0
    %1037 = vmatpush1.msra.mxu0 0.0
    %1038 = vmatprep.subr.mxu0 0.0
    %1039 = vmatpush1.msra.mxu0 0.0
    %1040 = vmatprep.subr.mxu0 0.0
    %1041 = vmatpush1.msra.mxu0 0.0
    %1042 = vmatprep.subr.mxu0 0.0
    %1043 = vmatpush1.msra.mxu0 0.0
    %1044 = vmatprep.subr.mxu0 0.0
    %1045 = vmatpush1.msra.mxu0 0.0
    %1046 = vmatprep.subr.mxu0 0.0
    %1047 = vmatpush1.msra.mxu0 0.0
    %1048 = vmatprep.subr.mxu0 0.0
    %1049 = vmatpush1.msra.mxu0 0.0
    %1050 = vmatprep.subr.mxu0 0.0
    %1051 = vmatpush1.msra.mxu0 0.0
    %1052 = vmatprep.subr.mxu0 0.0
    %1053 = vmatpush1.msra.mxu0 0.0
    %1054 = vmatprep.subr.mxu0 0.0
    %1055 = vmatpush1.msra.mxu0 0.0
    %1056 = vmatprep.subr.mxu0 0.0
    %1057 = vmatpush1.msra.mxu0 0.0
    %1058 = vmatprep.subr.mxu0 0.0
    %1059 = vmatpush1.msra.mxu0 0.0
    %1060 = vmatprep.subr.mxu0 0.0
    %1061 = vmatpush1.msra.mxu0 0.0
    %1062 = vmatprep.subr.mxu0 0.0
    %1063 = vmatpush1.msra.mxu0 0.0
    %1064 = vmatprep.subr.mxu0 0.0
    %1065 = vmatpush1.msra.mxu0 0.0
    %1066 = vmatprep.subr.mxu0 0.0
    %1067 = vmatpush1.msra.mxu0 0.0
    %1068 = vmatprep.subr.mxu0 0.0
    %1069 = vmatpush1.msra.mxu0 0.0
    %1070 = vmatprep.mubr.f32.mxu0 0.0
    %1071 = vmatmul.mubr.f32.gmra.mrb[0].mxu0 %v1004
    %v1072 = vpop.f32.mrb[0].mxu0
    %v1073 = vadd.f32 0.0, %v1072
    %v1074 = vpop.f32.mrb[0].mxu0
    %1075 = vdwg.mxu0
    %1076 = vst [vmem:[#allocation13] sm:$0xff] %v1073
    // Predicated region
    $region62: #{tpu_custom_call.1} parent=1 // pred_check
      _
    $region63: #{tpu_custom_call.1} parent=1 // pred_check_branch
      %1078 = sbr.rel (0) target = $region65
    $region64: #{tpu_custom_call.1} parent=1 // pred_region
      %s1080 = ssub.s32 128, 128
      %1081 = vsyncadd [#allocation6], %s1080
      %s1083 = sshll.u32 [#allocation12], 4
      %s1084 = int_to_ptr.vmem [resolvable:$true] %s1083
      %1086 = dma.vmem_to_hbm [thread:$0]  %s1084, 128, %s11, [#allocation6]
    $region65: #{tpu_custom_call.1} parent=1 // pred_fallthru
      _
    // Predicated region
    $region66: #{tpu_custom_call.1} parent=1 // pred_check
      _
    $region67: #{tpu_custom_call.1} parent=1 // pred_check_branch
      %1088 = sbr.rel (0) target = $region69
    $region68: #{tpu_custom_call.1} parent=1 // pred_region
      %s1090 = ssub.s32 128, 128
      %1091 = vsyncadd [#allocation14], %s1090
      %s1093 = sshll.u32 [#allocation13], 4
      %s1094 = int_to_ptr.vmem [resolvable:$true] %s1093
      %1096 = dma.vmem_to_hbm [thread:$0]  %s1094, 128, %s12, [#allocation14]
    $region69: #{tpu_custom_call.1} parent=1 // pred_fallthru
      _
    // Predicated region
    $region70: #{tpu_custom_call.1} parent=1 // pred_check
      _
    $region71: #{tpu_custom_call.1} parent=1 // pred_check_branch
      %1098 = sbr.rel (0) target = $region73
    $region72: #{tpu_custom_call.1} parent=1 // pred_region
      %1099 = dma.done [#allocation6], 128
    $region73: #{tpu_custom_call.1} parent=1 // pred_fallthru
      _
    // Predicated region
    $region74: #{tpu_custom_call.1} parent=1 // pred_check
      _
    $region75: #{tpu_custom_call.1} parent=1 // pred_check_branch
      %1101 = sbr.rel (0) target = $region77
    $region76: #{tpu_custom_call.1} parent=1 // pred_region
      %1102 = dma.done [#allocation14], 128
    $region77: #{tpu_custom_call.1} parent=1 // pred_fallthru
      _
    %1103 = vsyncpa [#allocation5], 1
    %1104 = vsyncpa [#allocation9], 1
    %1105 = vsyncpa [#allocation6], 1
    %1106 = vsyncpa [#allocation14], 1
    %1107 = vsyncpa [#allocation7], 1

</llo_original>
